<compile_context>
chip_gen: v7x
topology: tpu7x:2x2x1
jax: 0.10.0
libtpu: 0.0.40
codegen_flags: <defaults>
</compile_context>

<pallas_src>
import functools

import jax
import jax.numpy as jnp
from jax.experimental import pallas as pl
from jax.experimental.pallas import tpu as pltpu


_LANE_PAD = 128   # zero halo on each side of each image's flattened spatial axis
_BIAS_ROWS = 8    # sublane-aligned ones band appended to the patch (bias fold)


def _round_up(v, m):
    return (v + m - 1) // m * m


def _rnn_cell_kernel(x_ref, h0_ref, c0_ref, w_ref,
                     h_ref, c_ref,
                     base_ref, basef_ref, basel_ref, patch_ref,
                     *, Cin, CPX, CP, hidden, W, HW, NB):
    """Grid = (batch_blocks, T).  One recurrent step for NB images per call.

    x_ref:     (1, NB, Cin, HW)     x_t                        (MXU dtype)
    h0_ref:    (NB, hidden, HW)     initial hidden state        (MXU dtype)
    c0_ref:    (NB, hidden, HW)     initial cell state          (f32)
    w_ref:     (4*hidden, 9*CP+8)   packed conv weights + bias  (MXU dtype)
    h_ref:     (NB, hidden, HW)     output & resident h carry   (MXU dtype)
    c_ref:     (NB, hidden, HW)     output & resident c carry   (f32)
    base*_ref: (NB, CP, HW+2*PAD)   channel concat + halo scratch
    patch_ref: (9*CP+8, NB*HW)      im2col-style RHS of the fused gate matmul
    """
    PAD = _LANE_PAD
    t = pl.program_id(1)

    @pl.when(t == 0)
    def _init():
        # One-time (per batch block) zeroing: halos, padded channel rows, and
        # the constant ones band for the folded bias.  Interiors are fully
        # overwritten every step, so there is no per-step memset.
        zero = jnp.zeros(base_ref.shape, base_ref.dtype)
        base_ref[...] = zero
        basef_ref[...] = zero
        basel_ref[...] = zero
        patch_ref[9 * CP:, :] = jnp.ones(
            (patch_ref.shape[0] - 9 * CP, patch_ref.shape[1]), patch_ref.dtype)
        # Recurrent state lives in the revisited output blocks.
        h_ref[...] = h0_ref[...]
        c_ref[...] = c0_ref[...]

    # In-kernel border masks (a couple of VPU compares that overlap with the
    # matmul).  m_first zeroes image column 0 (for all dx=+1 taps), m_last
    # zeroes column W-1 (for all dx=-1 taps); top/bottom borders fall into the
    # zero lane halo.
    col = jax.lax.broadcasted_iota(jnp.int32, (1, HW), 1) % W
    not_first = col != 0
    not_last = col != (W - 1)

    # Channel concat + conv halo + the two pre-masked base variants, in VMEM.
    for n in range(NB):
        base_ref[n, 0:Cin, PAD:PAD + HW] = x_ref[0, n]
        base_ref[n, CPX:CPX + hidden, PAD:PAD + HW] = h_ref[n]
        interior = base_ref[n, :, PAD:PAD + HW]
        zeros = jnp.zeros_like(interior)
        basef_ref[n, :, PAD:PAD + HW] = jnp.where(not_first, interior, zeros)
        basel_ref[n, :, PAD:PAD + HW] = jnp.where(not_last, interior, zeros)

    # Fold the 9 conv taps into the contraction axis: each tap is a statically
    # shifted slice (shift = dy*W + dx along the flattened spatial axis)
    # written into a lane-aligned column band of the patch scratch.
    k = 0
    for dy in (-1, 0, 1):
        for dx in (-1, 0, 1):
            s = dy * W + dx
            src = basel_ref if dx == -1 else (basef_ref if dx == 1 else base_ref)
            for n in range(NB):
                patch_ref[k * CP:(k + 1) * CP, n * HW:(n + 1) * HW] = \
                    src[n, :, PAD + s:PAD + s + HW]
            k += 1

    # Single fused MXU matmul for all four gates of all NB images (+ bias via
    # the constant ones band), f32 accumulation.
    acc = jnp.dot(w_ref[...], patch_ref[...],
                  preferred_element_type=jnp.float32)     # (4*hidden, NB*HW)

    # Gate / cell math in f32; sigmoid via a single EUP tanh per element.
    for n in range(NB):
        a = acc[:, n * HW:(n + 1) * HW]
        i_g = 0.5 * jnp.tanh(0.5 * a[0 * hidden:1 * hidden]) + 0.5
        f_g = 0.5 * jnp.tanh(0.5 * a[1 * hidden:2 * hidden]) + 0.5
        o_g = 0.5 * jnp.tanh(0.5 * a[2 * hidden:3 * hidden]) + 0.5
        g_g = jnp.tanh(a[3 * hidden:4 * hidden])
        c_new = f_g * c_ref[n] + i_g * g_g
        h_new = o_g * jnp.tanh(c_new)
        c_ref[n] = c_new                                   # lane-dense store
        h_ref[n] = h_new.astype(h_ref.dtype)               # lane-dense store


def pack_rnn_cell_params(w_oihw, bias, input_size, hidden_size,
                         mxu_dtype=jnp.bfloat16):
    """Pack the four 3x3 convs (OIHW, gates stacked [in,forget,out,cell] along
    the output axis) plus bias into the kernel layout (4*hidden, 9*CP + 8).
    The bias lives in column 9*CP (the patch supplies a matching constant ones
    row band); columns 9*CP+1 .. 9*CP+7 are zero sublane padding."""
    G, C, KH, KW = w_oihw.shape
    assert (KH, KW) == (3, 3)
    assert C == input_size + hidden_size and G == 4 * hidden_size
    cpx = _round_up(input_size, 8)
    cph = _round_up(hidden_size, 8)
    cp = cpx + cph
    w_t = jnp.transpose(w_oihw, (0, 2, 3, 1)).reshape(G, KH * KW, C)
    w_t = w_t.astype(jnp.float32)
    wp = jnp.zeros((G, KH * KW, cp), jnp.float32)
    wp = wp.at[:, :, :input_size].set(w_t[:, :, :input_size])               # x
    wp = wp.at[:, :, cpx:cpx + hidden_size].set(w_t[:, :, input_size:])     # h
    wp = wp.reshape(G, KH * KW * cp)
    b_cols = jnp.zeros((G, _BIAS_ROWS), jnp.float32).at[:, 0].set(
        bias.astype(jnp.float32))
    return jnp.concatenate([wp, b_cols], axis=1).astype(mxu_dtype)


def rnn_cell_seq(xs, h_state, c_state, w_packed, *, batch_block=None):
    """Fused T-step ConvLSTM recurrence in ONE pallas_call (NCHW layouts).

    xs:       (T, N, Cin, H, W)    MXU dtype (bf16 recommended on v6e/v7x)
    h_state:  (N, hidden, H, W)    initial hidden state
    c_state:  (N, hidden, H, W)    initial cell state; pass f32 so the HBM
                                   buffer is truly aliased / carried in place
    w_packed: (4*hidden, 9*CP+8)   from pack_rnn_cell_params
    Returns the final (h_T, c_T).
    """
    T, N, Cin, H, W = xs.shape
    hidden = h_state.shape[1]
    HW = H * W
    assert W + 1 <= _LANE_PAD, "image width too large for the fixed lane halo"
    assert HW % 128 == 0, "flattened spatial axis must be lane-dense"

    cdt = xs.dtype
    cpx = _round_up(Cin, 8)
    cph = _round_up(hidden, 8)
    cp = cpx + cph
    KP = 9 * cp + _BIAS_ROWS
    assert w_packed.shape == (4 * hidden, KP)
    if w_packed.dtype != cdt:            # static check -> no per-call cast op
        w_packed = w_packed.astype(cdt)  # when the caller packed in cdt already

    NB = N if batch_block is None else batch_block
    assert N % NB == 0
    nblk = N // NB
    HWp = HW + 2 * _LANE_PAD

    # Free (contiguous) reshapes only: flattened spatial axis on lanes.
    xs3 = xs.reshape(T, N, Cin, HW)
    h3 = h_state.reshape(N, hidden, HW).astype(cdt)
    c3 = c_state.astype(jnp.float32).reshape(N, hidden, HW)

    kernel = functools.partial(_rnn_cell_kernel, Cin=Cin, CPX=cpx, CP=cp,
                               hidden=hidden, W=W, HW=HW, NB=NB)

    h_out, c_out = pl.pallas_call(
        kernel,
        out_shape=(jax.ShapeDtypeStruct((N, hidden, HW), cdt),
                   jax.ShapeDtypeStruct((N, hidden, HW), jnp.float32)),
        grid=(nblk, T),
        in_specs=[
            pl.BlockSpec((1, NB, Cin, HW), lambda b, t: (t, b, 0, 0)),   # x_t
            pl.BlockSpec((NB, hidden, HW), lambda b, t: (b, 0, 0)),      # h0
            pl.BlockSpec((NB, hidden, HW), lambda b, t: (b, 0, 0)),      # c0
            pl.BlockSpec((4 * hidden, KP), lambda b, t: (0, 0)),         # w+bias
        ],
        out_specs=(
            pl.BlockSpec((NB, hidden, HW), lambda b, t: (b, 0, 0)),      # h carry
            pl.BlockSpec((NB, hidden, HW), lambda b, t: (b, 0, 0)),      # c carry
        ),
        scratch_shapes=[
            pltpu.VMEM((NB, cp, HWp), cdt),        # base (x;h concat + halo)
            pltpu.VMEM((NB, cp, HWp), cdt),        # base with image col 0 zeroed
            pltpu.VMEM((NB, cp, HWp), cdt),        # base with image col W-1 zeroed
            pltpu.VMEM((KP, NB * HW), cdt),        # patch (9 taps + ones band)
        ],
        input_output_aliases={2: 1},               # c's HBM buffer reused in place
        compiler_params=pltpu.CompilerParams(
            # Batch blocks are independent; time is a true recurrence.  On v7x
            # use batch_block=N//2 (and optionally pltpu.CORE_PARALLEL) so both
            # TensorCores get a batch block.
            dimension_semantics=("parallel", "arbitrary"),
            vmem_limit_bytes=32 * 1024 * 1024),
    )(xs3, h3, c3, w_packed)

    return (h_out.reshape(N, hidden, H, W),
            c_out.reshape(N, hidden, H, W))


def rnn_cell(x, h_state, c_state, w_packed, *, batch_block=None):
    """Single ConvLSTM cell step == the PyTorch module's forward (NCHW)."""
    return rnn_cell_seq(x[None], h_state, c_state, w_packed,
                        batch_block=batch_block)


def _reference_step(x, h, c, w_oihw, bias):
    """Pure-JAX f32 reference of the PyTorch forward (NCHW / OIHW)."""
    hid = h.shape[1]
    xh = jnp.concatenate([x, h], axis=1)
    conv = jax.lax.conv_general_dilated(
        xh, w_oihw, window_strides=(1, 1), padding=((1, 1), (1, 1)),
        dimension_numbers=("NCHW", "OIHW", "NCHW"))
    conv = conv + bias.reshape(1, -1, 1, 1)
    i = jax.nn.sigmoid(conv[:, 0 * hid:1 * hid])
    f = jax.nn.sigmoid(conv[:, 1 * hid:2 * hid])
    o = jax.nn.sigmoid(conv[:, 2 * hid:3 * hid])
    g = jnp.tanh(conv[:, 3 * hid:4 * hid])
    c_new = f * c + i * g
    h_new = o * jnp.tanh(c_new)
    return h_new, c_new


def _reference_seq(xs, h, c, w_oihw, bias):
    for t in range(xs.shape[0]):
        h, c = _reference_step(xs[t], h, c, w_oihw, bias)
        # The kernel carries h across steps in its MXU dtype (bf16).
        h = h.astype(jnp.bfloat16).astype(jnp.float32)
    return h, c


if __name__ == "__main__":
    N, H, W = 2, 16, 16
    T = 4
    input_size, hidden_size = 4, 8
    C = input_size + hidden_size

    key = jax.random.PRNGKey(0)
    kx, kh, kc, kw, kb = jax.random.split(key, 5)

    xs = jax.random.normal(kx, (T, N, input_size, H, W), jnp.float32
                           ).astype(jnp.bfloat16)
    h0 = jax.random.normal(kh, (N, hidden_size, H, W), jnp.float32
                           ).astype(jnp.bfloat16)
    c0 = jax.random.normal(kc, (N, hidden_size, H, W), jnp.float32)

    # Synthetic parameters: the 4 gate convs stacked along the output-channel
    # axis in order [in, forget, out, cell] (OIHW), plus bias.
    w_bf = (0.1 * jax.random.normal(kw, (4 * hidden_size, C, 3, 3), jnp.float32)
            ).astype(jnp.bfloat16)
    bias = 0.1 * jax.random.normal(kb, (4 * hidden_size,), jnp.float32)

    w_packed = pack_rnn_cell_params(w_bf, bias, input_size, hidden_size)

    # f32 references on the same (bf16-rounded) operands; computed before the
    # kernel calls since the c input buffer is donated via input_output_aliases.
    w_f32 = w_bf.astype(jnp.float32)
    h_want1, c_want1 = _reference_step(xs[0].astype(jnp.float32),
                                       h0.astype(jnp.float32), c0, w_f32, bias)
    h_wantT, c_wantT = _reference_seq(xs.astype(jnp.float32),
                                      h0.astype(jnp.float32), c0, w_f32, bias)

    # --- single cell step (the module's forward) ---
    h1, c1 = rnn_cell(xs[0], h0, jnp.copy(c0), w_packed)
    jax.block_until_ready((h1, c1))
    assert h1.shape == (N, hidden_size, H, W) and h1.dtype == jnp.bfloat16
    assert c1.shape == (N, hidden_size, H, W) and c1.dtype == jnp.float32
    assert jnp.allclose(c1, c_want1, atol=5e-3, rtol=5e-3), \
        float(jnp.max(jnp.abs(c1 - c_want1)))
    assert jnp.allclose(h1.astype(jnp.float32), h_want1, atol=1e-2, rtol=1e-2), \
        float(jnp.max(jnp.abs(h1.astype(jnp.float32) - h_want1)))

    # --- fused T-step recurrence: one pallas_call, h/c resident in VMEM ---
    hT, cT = rnn_cell_seq(xs, h0, jnp.copy(c0), w_packed)
    jax.block_until_ready((hT, cT))
    assert hT.shape == (N, hidden_size, H, W) and hT.dtype == jnp.bfloat16
    assert cT.shape == (N, hidden_size, H, W) and cT.dtype == jnp.float32
    assert jnp.allclose(cT, c_wantT, atol=2e-2, rtol=2e-2), \
        float(jnp.max(jnp.abs(cT - c_wantT)))
    assert jnp.allclose(hT.astype(jnp.float32), h_wantT, atol=2e-2, rtol=2e-2), \
        float(jnp.max(jnp.abs(hT.astype(jnp.float32) - h_wantT)))

    print("KERNEL_OK")
</pallas_src>

<mosaic_0001>
module attributes {stable_mosaic.version = 11 : i64} {
  func.func @_rnn_cell_kernel(%arg0: i32, %arg1: i32, %arg2: memref<1x2x4x256xbf16, #tpu.memory_space<vmem>>, %arg3: memref<2x8x256xbf16, #tpu.memory_space<vmem>>, %arg4: memref<2x8x256xf32, #tpu.memory_space<vmem>>, %arg5: memref<32x152xbf16, #tpu.memory_space<vmem>>, %arg6: memref<2x8x256xbf16, #tpu.memory_space<vmem>>, %arg7: memref<2x8x256xf32, #tpu.memory_space<vmem>>, %arg8: memref<2x16x512xbf16, #tpu.memory_space<vmem>>, %arg9: memref<2x16x512xbf16, #tpu.memory_space<vmem>>, %arg10: memref<2x16x512xbf16, #tpu.memory_space<vmem>>, %arg11: memref<152x512xbf16, #tpu.memory_space<vmem>>) attributes {dimension_semantics = [#tpu.dimension_semantics<parallel>, #tpu.dimension_semantics<arbitrary>], iteration_bounds = array<i64: 1, 1>, scalar_prefetch = 0 : i64, scratch_operands = 4 : i64, tpu.core_type = #tpu.core_type<tc>, window_params = [{transform_indices = @transform_0, window_bounds = array<i64: 1, 2, 4, 256>}, {transform_indices = @transform_1, window_bounds = array<i64: 2, 8, 256>}, {transform_indices = @transform_2, window_bounds = array<i64: 2, 8, 256>}, {pipeline_mode = #tpu.pipeline_mode<synchronous>, transform_indices = @transform_3, window_bounds = array<i64: 32, 152>}, {transform_indices = @transform_4, window_bounds = array<i64: 2, 8, 256>}, {transform_indices = @transform_5, window_bounds = array<i64: 2, 8, 256>}]} {
    %c0_i32 = arith.constant 0 : i32
    %0 = arith.cmpi eq, %arg1, %c0_i32 : i32
    %1 = arith.extui %0 : i1 to i32
    %c0_i32_0 = arith.constant 0 : i32
    %2 = arith.cmpi ne, %1, %c0_i32_0 : i32
    scf.if %2 {
      %cst_163 = arith.constant 0.000000e+00 : bf16
      %213 = vector.broadcast %cst_163 : bf16 to vector<2x16x512xbf16>
      %c0_164 = arith.constant 0 : index
      %c0_165 = arith.constant 0 : index
      %c0_166 = arith.constant 0 : index
      %214 = vector.load %arg8[%c0_164, %c0_165, %c0_166] : memref<2x16x512xbf16, #tpu.memory_space<vmem>>, vector<2x16x512xbf16>
      tpu.vector_store %arg8[%c0_164, %c0_165, %c0_166], %213 {strides = array<i32>} : memref<2x16x512xbf16, #tpu.memory_space<vmem>>, vector<2x16x512xbf16>,
      %c0_167 = arith.constant 0 : index
      %c0_168 = arith.constant 0 : index
      %c0_169 = arith.constant 0 : index
      %215 = vector.load %arg9[%c0_167, %c0_168, %c0_169] : memref<2x16x512xbf16, #tpu.memory_space<vmem>>, vector<2x16x512xbf16>
      tpu.vector_store %arg9[%c0_167, %c0_168, %c0_169], %213 {strides = array<i32>} : memref<2x16x512xbf16, #tpu.memory_space<vmem>>, vector<2x16x512xbf16>,
      %c0_170 = arith.constant 0 : index
      %c0_171 = arith.constant 0 : index
      %c0_172 = arith.constant 0 : index
      %216 = vector.load %arg10[%c0_170, %c0_171, %c0_172] : memref<2x16x512xbf16, #tpu.memory_space<vmem>>, vector<2x16x512xbf16>
      tpu.vector_store %arg10[%c0_170, %c0_171, %c0_172], %213 {strides = array<i32>} : memref<2x16x512xbf16, #tpu.memory_space<vmem>>, vector<2x16x512xbf16>,
      %cst_173 = arith.constant 1.000000e+00 : bf16
      %217 = vector.broadcast %cst_173 : bf16 to vector<8x512xbf16>
      %c144_174 = arith.constant 144 : index
      %c0_175 = arith.constant 0 : index
      %218 = vector.load %arg11[%c144_174, %c0_175] : memref<152x512xbf16, #tpu.memory_space<vmem>>, vector<8x512xbf16>
      tpu.vector_store %arg11[%c144_174, %c0_175], %217 {strides = array<i32>} : memref<152x512xbf16, #tpu.memory_space<vmem>>, vector<8x512xbf16>,
      %c0_176 = arith.constant 0 : index
      %c0_177 = arith.constant 0 : index
      %c0_178 = arith.constant 0 : index
      %219 = vector.load %arg3[%c0_176, %c0_177, %c0_178] : memref<2x8x256xbf16, #tpu.memory_space<vmem>>, vector<2x8x256xbf16>
      %c0_179 = arith.constant 0 : index
      %c0_180 = arith.constant 0 : index
      %c0_181 = arith.constant 0 : index
      %220 = vector.load %arg6[%c0_179, %c0_180, %c0_181] : memref<2x8x256xbf16, #tpu.memory_space<vmem>>, vector<2x8x256xbf16>
      tpu.vector_store %arg6[%c0_179, %c0_180, %c0_181], %219 {strides = array<i32>} : memref<2x8x256xbf16, #tpu.memory_space<vmem>>, vector<2x8x256xbf16>,
      %c0_182 = arith.constant 0 : index
      %c0_183 = arith.constant 0 : index
      %c0_184 = arith.constant 0 : index
      %221 = vector.load %arg4[%c0_182, %c0_183, %c0_184] : memref<2x8x256xf32, #tpu.memory_space<vmem>>, vector<2x8x256xf32>
      %c0_185 = arith.constant 0 : index
      %c0_186 = arith.constant 0 : index
      %c0_187 = arith.constant 0 : index
      %222 = vector.load %arg7[%c0_185, %c0_186, %c0_187] : memref<2x8x256xf32, #tpu.memory_space<vmem>>, vector<2x8x256xf32>
      tpu.vector_store %arg7[%c0_185, %c0_186, %c0_187], %221 {strides = array<i32>} : memref<2x8x256xf32, #tpu.memory_space<vmem>>, vector<2x8x256xf32>,
    } else {
    }
    %3 = tpu.iota {dimensions = array<i32: 1>} : vector<1x256xi32>
    %c16_i32 = arith.constant 16 : i32
    %c0_i32_1 = arith.constant 0 : i32
    %4 = arith.cmpi eq, %c16_i32, %c0_i32_1 : i32
    %c1_i32 = arith.constant 1 : i32
    %5 = arith.select %4, %c1_i32, %c16_i32 : i32
    %6 = vector.broadcast %5 : i32 to vector<1x256xi32>
    %7 = arith.remsi %3, %6 : vector<1x256xi32>
    %c0_i32_2 = arith.constant 0 : i32
    %8 = vector.broadcast %c0_i32_2 : i32 to vector<1x256xi32>
    %9 = arith.cmpi ne, %7, %8 : vector<1x256xi32>
    %c0_i32_3 = arith.constant 0 : i32
    %10 = vector.broadcast %c0_i32_3 : i32 to vector<1x256xi32>
    %11 = arith.cmpi slt, %7, %10 : vector<1x256xi32>
    %c0_i32_4 = arith.constant 0 : i32
    %12 = arith.cmpi slt, %5, %c0_i32_4 : i32
    %13 = vector.broadcast %12 : i1 to vector<1x256xi1>
    %14 = vector.broadcast %13 : vector<1x256xi1> to vector<1x256xi1>
    %15 = arith.xori %11, %14 : vector<1x256xi1>
    %16 = arith.andi %15, %9 : vector<1x256xi1>
    %17 = vector.broadcast %5 : i32 to vector<1x256xi32>
    %18 = arith.addi %7, %17 : vector<1x256xi32>
    %19 = arith.select %16, %18, %7 : vector<1x256xi1>, vector<1x256xi32>
    %c0_i32_5 = arith.constant 0 : i32
    %20 = vector.broadcast %c0_i32_5 : i32 to vector<1x256xi32>
    %21 = arith.cmpi ne, %19, %20 : vector<1x256xi32>
    %c15_i32 = arith.constant 15 : i32
    %22 = vector.broadcast %c15_i32 : i32 to vector<1x256xi32>
    %23 = arith.cmpi ne, %19, %22 : vector<1x256xi32>
    %c0 = arith.constant 0 : index
    %c0_6 = arith.constant 0 : index
    %c0_7 = arith.constant 0 : index
    %c0_8 = arith.constant 0 : index
    %24 = vector.load %arg2[%c0, %c0_6, %c0_7, %c0_8] : memref<1x2x4x256xbf16, #tpu.memory_space<vmem>>, vector<1x1x4x256xbf16>
    %25 = vector.shape_cast %24 : vector<1x1x4x256xbf16> to vector<4x256xbf16>
    %c0_9 = arith.constant 0 : index
    %c0_10 = arith.constant 0 : index
    %c128 = arith.constant 128 : index
    %26 = vector.load %arg8[%c0_9, %c0_10, %c128] : memref<2x16x512xbf16, #tpu.memory_space<vmem>>, vector<1x4x256xbf16>
    %27 = vector.shape_cast %26 : vector<1x4x256xbf16> to vector<4x256xbf16>
    %28 = vector.shape_cast %25 : vector<4x256xbf16> to vector<1x4x256xbf16>
    tpu.vector_store %arg8[%c0_9, %c0_10, %c128], %28 {strides = array<i32>} : memref<2x16x512xbf16, #tpu.memory_space<vmem>>, vector<1x4x256xbf16>,
    %c0_11 = arith.constant 0 : index
    %c0_12 = arith.constant 0 : index
    %c0_13 = arith.constant 0 : index
    %29 = vector.load %arg6[%c0_11, %c0_12, %c0_13] : memref<2x8x256xbf16, #tpu.memory_space<vmem>>, vector<1x8x256xbf16>
    %30 = vector.shape_cast %29 : vector<1x8x256xbf16> to vector<8x256xbf16>
    %c0_14 = arith.constant 0 : index
    %c8 = arith.constant 8 : index
    %c128_15 = arith.constant 128 : index
    %31 = vector.load %arg8[%c0_14, %c8, %c128_15] : memref<2x16x512xbf16, #tpu.memory_space<vmem>>, vector<1x8x256xbf16>
    %32 = vector.shape_cast %31 : vector<1x8x256xbf16> to vector<8x256xbf16>
    %33 = vector.shape_cast %30 : vector<8x256xbf16> to vector<1x8x256xbf16>
    tpu.vector_store %arg8[%c0_14, %c8, %c128_15], %33 {strides = array<i32>} : memref<2x16x512xbf16, #tpu.memory_space<vmem>>, vector<1x8x256xbf16>,
    %c0_16 = arith.constant 0 : index
    %c0_17 = arith.constant 0 : index
    %c128_18 = arith.constant 128 : index
    %34 = vector.load %arg8[%c0_16, %c0_17, %c128_18] : memref<2x16x512xbf16, #tpu.memory_space<vmem>>, vector<1x16x256xbf16>
    %35 = vector.shape_cast %34 : vector<1x16x256xbf16> to vector<16x256xbf16>
    %cst = arith.constant 0.000000e+00 : bf16
    %36 = vector.broadcast %cst : bf16 to vector<16x256xbf16>
    %37 = vector.shape_cast %21 : vector<1x256xi1> to vector<1x256xi1>
    %38 = vector.broadcast %37 : vector<1x256xi1> to vector<16x256xi1>
    %39 = arith.select %38, %35, %36 : vector<16x256xi1>, vector<16x256xbf16>
    %c0_19 = arith.constant 0 : index
    %c0_20 = arith.constant 0 : index
    %c128_21 = arith.constant 128 : index
    %40 = vector.load %arg9[%c0_19, %c0_20, %c128_21] : memref<2x16x512xbf16, #tpu.memory_space<vmem>>, vector<1x16x256xbf16>
    %41 = vector.shape_cast %40 : vector<1x16x256xbf16> to vector<16x256xbf16>
    %42 = vector.shape_cast %39 : vector<16x256xbf16> to vector<1x16x256xbf16>
    tpu.vector_store %arg9[%c0_19, %c0_20, %c128_21], %42 {strides = array<i32>} : memref<2x16x512xbf16, #tpu.memory_space<vmem>>, vector<1x16x256xbf16>,
    %43 = vector.shape_cast %23 : vector<1x256xi1> to vector<1x256xi1>
    %44 = vector.broadcast %43 : vector<1x256xi1> to vector<16x256xi1>
    %45 = arith.select %44, %35, %36 : vector<16x256xi1>, vector<16x256xbf16>
    %c0_22 = arith.constant 0 : index
    %c0_23 = arith.constant 0 : index
    %c128_24 = arith.constant 128 : index
    %46 = vector.load %arg10[%c0_22, %c0_23, %c128_24] : memref<2x16x512xbf16, #tpu.memory_space<vmem>>, vector<1x16x256xbf16>
    %47 = vector.shape_cast %46 : vector<1x16x256xbf16> to vector<16x256xbf16>
    %48 = vector.shape_cast %45 : vector<16x256xbf16> to vector<1x16x256xbf16>
    tpu.vector_store %arg10[%c0_22, %c0_23, %c128_24], %48 {strides = array<i32>} : memref<2x16x512xbf16, #tpu.memory_space<vmem>>, vector<1x16x256xbf16>,
    %c0_25 = arith.constant 0 : index
    %c1 = arith.constant 1 : index
    %c0_26 = arith.constant 0 : index
    %c0_27 = arith.constant 0 : index
    %49 = vector.load %arg2[%c0_25, %c1, %c0_26, %c0_27] : memref<1x2x4x256xbf16, #tpu.memory_space<vmem>>, vector<1x1x4x256xbf16>
    %50 = vector.shape_cast %49 : vector<1x1x4x256xbf16> to vector<4x256xbf16>
    %c1_28 = arith.constant 1 : index
    %c0_29 = arith.constant 0 : index
    %c128_30 = arith.constant 128 : index
    %51 = vector.load %arg8[%c1_28, %c0_29, %c128_30] : memref<2x16x512xbf16, #tpu.memory_space<vmem>>, vector<1x4x256xbf16>
    %52 = vector.shape_cast %51 : vector<1x4x256xbf16> to vector<4x256xbf16>
    %53 = vector.shape_cast %50 : vector<4x256xbf16> to vector<1x4x256xbf16>
    tpu.vector_store %arg8[%c1_28, %c0_29, %c128_30], %53 {strides = array<i32>} : memref<2x16x512xbf16, #tpu.memory_space<vmem>>, vector<1x4x256xbf16>,
    %c1_31 = arith.constant 1 : index
    %c0_32 = arith.constant 0 : index
    %c0_33 = arith.constant 0 : index
    %54 = vector.load %arg6[%c1_31, %c0_32, %c0_33] : memref<2x8x256xbf16, #tpu.memory_space<vmem>>, vector<1x8x256xbf16>
    %55 = vector.shape_cast %54 : vector<1x8x256xbf16> to vector<8x256xbf16>
    %c1_34 = arith.constant 1 : index
    %c8_35 = arith.constant 8 : index
    %c128_36 = arith.constant 128 : index
    %56 = vector.load %arg8[%c1_34, %c8_35, %c128_36] : memref<2x16x512xbf16, #tpu.memory_space<vmem>>, vector<1x8x256xbf16>
    %57 = vector.shape_cast %56 : vector<1x8x256xbf16> to vector<8x256xbf16>
    %58 = vector.shape_cast %55 : vector<8x256xbf16> to vector<1x8x256xbf16>
    tpu.vector_store %arg8[%c1_34, %c8_35, %c128_36], %58 {strides = array<i32>} : memref<2x16x512xbf16, #tpu.memory_space<vmem>>, vector<1x8x256xbf16>,
    %c1_37 = arith.constant 1 : index
    %c0_38 = arith.constant 0 : index
    %c128_39 = arith.constant 128 : index
    %59 = vector.load %arg8[%c1_37, %c0_38, %c128_39] : memref<2x16x512xbf16, #tpu.memory_space<vmem>>, vector<1x16x256xbf16>
    %60 = vector.shape_cast %59 : vector<1x16x256xbf16> to vector<16x256xbf16>
    %cst_40 = arith.constant 0.000000e+00 : bf16
    %61 = vector.broadcast %cst_40 : bf16 to vector<16x256xbf16>
    %62 = vector.shape_cast %21 : vector<1x256xi1> to vector<1x256xi1>
    %63 = vector.broadcast %62 : vector<1x256xi1> to vector<16x256xi1>
    %64 = arith.select %63, %60, %61 : vector<16x256xi1>, vector<16x256xbf16>
    %c1_41 = arith.constant 1 : index
    %c0_42 = arith.constant 0 : index
    %c128_43 = arith.constant 128 : index
    %65 = vector.load %arg9[%c1_41, %c0_42, %c128_43] : memref<2x16x512xbf16, #tpu.memory_space<vmem>>, vector<1x16x256xbf16>
    %66 = vector.shape_cast %65 : vector<1x16x256xbf16> to vector<16x256xbf16>
    %67 = vector.shape_cast %64 : vector<16x256xbf16> to vector<1x16x256xbf16>
    tpu.vector_store %arg9[%c1_41, %c0_42, %c128_43], %67 {strides = array<i32>} : memref<2x16x512xbf16, #tpu.memory_space<vmem>>, vector<1x16x256xbf16>,
    %68 = vector.shape_cast %23 : vector<1x256xi1> to vector<1x256xi1>
    %69 = vector.broadcast %68 : vector<1x256xi1> to vector<16x256xi1>
    %70 = arith.select %69, %60, %61 : vector<16x256xi1>, vector<16x256xbf16>
    %c1_44 = arith.constant 1 : index
    %c0_45 = arith.constant 0 : index
    %c128_46 = arith.constant 128 : index
    %71 = vector.load %arg10[%c1_44, %c0_45, %c128_46] : memref<2x16x512xbf16, #tpu.memory_space<vmem>>, vector<1x16x256xbf16>
    %72 = vector.shape_cast %71 : vector<1x16x256xbf16> to vector<16x256xbf16>
    %73 = vector.shape_cast %70 : vector<16x256xbf16> to vector<1x16x256xbf16>
    tpu.vector_store %arg10[%c1_44, %c0_45, %c128_46], %73 {strides = array<i32>} : memref<2x16x512xbf16, #tpu.memory_space<vmem>>, vector<1x16x256xbf16>,
    %c0_47 = arith.constant 0 : index
    %c0_48 = arith.constant 0 : index
    %c111 = arith.constant 111 : index
    %74 = vector.load %arg10[%c0_47, %c0_48, %c111] : memref<2x16x512xbf16, #tpu.memory_space<vmem>>, vector<1x16x256xbf16>
    %75 = vector.shape_cast %74 : vector<1x16x256xbf16> to vector<16x256xbf16>
    %c0_49 = arith.constant 0 : index
    %c0_50 = arith.constant 0 : index
    %76 = vector.load %arg11[%c0_49, %c0_50] : memref<152x512xbf16, #tpu.memory_space<vmem>>, vector<16x256xbf16>
    tpu.vector_store %arg11[%c0_49, %c0_50], %75 {strides = array<i32>} : memref<152x512xbf16, #tpu.memory_space<vmem>>, vector<16x256xbf16>,
    %c1_51 = arith.constant 1 : index
    %c0_52 = arith.constant 0 : index
    %c111_53 = arith.constant 111 : index
    %77 = vector.load %arg10[%c1_51, %c0_52, %c111_53] : memref<2x16x512xbf16, #tpu.memory_space<vmem>>, vector<1x16x256xbf16>
    %78 = vector.shape_cast %77 : vector<1x16x256xbf16> to vector<16x256xbf16>
    %c0_54 = arith.constant 0 : index
    %c256 = arith.constant 256 : index
    %79 = vector.load %arg11[%c0_54, %c256] : memref<152x512xbf16, #tpu.memory_space<vmem>>, vector<16x256xbf16>
    tpu.vector_store %arg11[%c0_54, %c256], %78 {strides = array<i32>} : memref<152x512xbf16, #tpu.memory_space<vmem>>, vector<16x256xbf16>,
    %c0_55 = arith.constant 0 : index
    %c0_56 = arith.constant 0 : index
    %c112 = arith.constant 112 : index
    %80 = vector.load %arg8[%c0_55, %c0_56, %c112] : memref<2x16x512xbf16, #tpu.memory_space<vmem>>, vector<1x16x256xbf16>
    %81 = vector.shape_cast %80 : vector<1x16x256xbf16> to vector<16x256xbf16>
    %c16 = arith.constant 16 : index
    %c0_57 = arith.constant 0 : index
    %82 = vector.load %arg11[%c16, %c0_57] : memref<152x512xbf16, #tpu.memory_space<vmem>>, vector<16x256xbf16>
    tpu.vector_store %arg11[%c16, %c0_57], %81 {strides = array<i32>} : memref<152x512xbf16, #tpu.memory_space<vmem>>, vector<16x256xbf16>,
    %c1_58 = arith.constant 1 : index
    %c0_59 = arith.constant 0 : index
    %c112_60 = arith.constant 112 : index
    %83 = vector.load %arg8[%c1_58, %c0_59, %c112_60] : memref<2x16x512xbf16, #tpu.memory_space<vmem>>, vector<1x16x256xbf16>
    %84 = vector.shape_cast %83 : vector<1x16x256xbf16> to vector<16x256xbf16>
    %c16_61 = arith.constant 16 : index
    %c256_62 = arith.constant 256 : index
    %85 = vector.load %arg11[%c16_61, %c256_62] : memref<152x512xbf16, #tpu.memory_space<vmem>>, vector<16x256xbf16>
    tpu.vector_store %arg11[%c16_61, %c256_62], %84 {strides = array<i32>} : memref<152x512xbf16, #tpu.memory_space<vmem>>, vector<16x256xbf16>,
    %c0_63 = arith.constant 0 : index
    %c0_64 = arith.constant 0 : index
    %c113 = arith.constant 113 : index
    %86 = vector.load %arg9[%c0_63, %c0_64, %c113] : memref<2x16x512xbf16, #tpu.memory_space<vmem>>, vector<1x16x256xbf16>
    %87 = vector.shape_cast %86 : vector<1x16x256xbf16> to vector<16x256xbf16>
    %c32 = arith.constant 32 : index
    %c0_65 = arith.constant 0 : index
    %88 = vector.load %arg11[%c32, %c0_65] : memref<152x512xbf16, #tpu.memory_space<vmem>>, vector<16x256xbf16>
    tpu.vector_store %arg11[%c32, %c0_65], %87 {strides = array<i32>} : memref<152x512xbf16, #tpu.memory_space<vmem>>, vector<16x256xbf16>,
    %c1_66 = arith.constant 1 : index
    %c0_67 = arith.constant 0 : index
    %c113_68 = arith.constant 113 : index
    %89 = vector.load %arg9[%c1_66, %c0_67, %c113_68] : memref<2x16x512xbf16, #tpu.memory_space<vmem>>, vector<1x16x256xbf16>
    %90 = vector.shape_cast %89 : vector<1x16x256xbf16> to vector<16x256xbf16>
    %c32_69 = arith.constant 32 : index
    %c256_70 = arith.constant 256 : index
    %91 = vector.load %arg11[%c32_69, %c256_70] : memref<152x512xbf16, #tpu.memory_space<vmem>>, vector<16x256xbf16>
    tpu.vector_store %arg11[%c32_69, %c256_70], %90 {strides = array<i32>} : memref<152x512xbf16, #tpu.memory_space<vmem>>, vector<16x256xbf16>,
    %c0_71 = arith.constant 0 : index
    %c0_72 = arith.constant 0 : index
    %c127 = arith.constant 127 : index
    %92 = vector.load %arg10[%c0_71, %c0_72, %c127] : memref<2x16x512xbf16, #tpu.memory_space<vmem>>, vector<1x16x256xbf16>
    %93 = vector.shape_cast %92 : vector<1x16x256xbf16> to vector<16x256xbf16>
    %c48 = arith.constant 48 : index
    %c0_73 = arith.constant 0 : index
    %94 = vector.load %arg11[%c48, %c0_73] : memref<152x512xbf16, #tpu.memory_space<vmem>>, vector<16x256xbf16>
    tpu.vector_store %arg11[%c48, %c0_73], %93 {strides = array<i32>} : memref<152x512xbf16, #tpu.memory_space<vmem>>, vector<16x256xbf16>,
    %c1_74 = arith.constant 1 : index
    %c0_75 = arith.constant 0 : index
    %c127_76 = arith.constant 127 : index
    %95 = vector.load %arg10[%c1_74, %c0_75, %c127_76] : memref<2x16x512xbf16, #tpu.memory_space<vmem>>, vector<1x16x256xbf16>
    %96 = vector.shape_cast %95 : vector<1x16x256xbf16> to vector<16x256xbf16>
    %c48_77 = arith.constant 48 : index
    %c256_78 = arith.constant 256 : index
    %97 = vector.load %arg11[%c48_77, %c256_78] : memref<152x512xbf16, #tpu.memory_space<vmem>>, vector<16x256xbf16>
    tpu.vector_store %arg11[%c48_77, %c256_78], %96 {strides = array<i32>} : memref<152x512xbf16, #tpu.memory_space<vmem>>, vector<16x256xbf16>,
    %c0_79 = arith.constant 0 : index
    %c0_80 = arith.constant 0 : index
    %c128_81 = arith.constant 128 : index
    %98 = vector.load %arg8[%c0_79, %c0_80, %c128_81] : memref<2x16x512xbf16, #tpu.memory_space<vmem>>, vector<1x16x256xbf16>
    %99 = vector.shape_cast %98 : vector<1x16x256xbf16> to vector<16x256xbf16>
    %c64 = arith.constant 64 : index
    %c0_82 = arith.constant 0 : index
    %100 = vector.load %arg11[%c64, %c0_82] : memref<152x512xbf16, #tpu.memory_space<vmem>>, vector<16x256xbf16>
    tpu.vector_store %arg11[%c64, %c0_82], %99 {strides = array<i32>} : memref<152x512xbf16, #tpu.memory_space<vmem>>, vector<16x256xbf16>,
    %c1_83 = arith.constant 1 : index
    %c0_84 = arith.constant 0 : index
    %c128_85 = arith.constant 128 : index
    %101 = vector.load %arg8[%c1_83, %c0_84, %c128_85] : memref<2x16x512xbf16, #tpu.memory_space<vmem>>, vector<1x16x256xbf16>
    %102 = vector.shape_cast %101 : vector<1x16x256xbf16> to vector<16x256xbf16>
    %c64_86 = arith.constant 64 : index
    %c256_87 = arith.constant 256 : index
    %103 = vector.load %arg11[%c64_86, %c256_87] : memref<152x512xbf16, #tpu.memory_space<vmem>>, vector<16x256xbf16>
    tpu.vector_store %arg11[%c64_86, %c256_87], %102 {strides = array<i32>} : memref<152x512xbf16, #tpu.memory_space<vmem>>, vector<16x256xbf16>,
    %c0_88 = arith.constant 0 : index
    %c0_89 = arith.constant 0 : index
    %c129 = arith.constant 129 : index
    %104 = vector.load %arg9[%c0_88, %c0_89, %c129] : memref<2x16x512xbf16, #tpu.memory_space<vmem>>, vector<1x16x256xbf16>
    %105 = vector.shape_cast %104 : vector<1x16x256xbf16> to vector<16x256xbf16>
    %c80 = arith.constant 80 : index
    %c0_90 = arith.constant 0 : index
    %106 = vector.load %arg11[%c80, %c0_90] : memref<152x512xbf16, #tpu.memory_space<vmem>>, vector<16x256xbf16>
    tpu.vector_store %arg11[%c80, %c0_90], %105 {strides = array<i32>} : memref<152x512xbf16, #tpu.memory_space<vmem>>, vector<16x256xbf16>,
    %c1_91 = arith.constant 1 : index
    %c0_92 = arith.constant 0 : index
    %c129_93 = arith.constant 129 : index
    %107 = vector.load %arg9[%c1_91, %c0_92, %c129_93] : memref<2x16x512xbf16, #tpu.memory_space<vmem>>, vector<1x16x256xbf16>
    %108 = vector.shape_cast %107 : vector<1x16x256xbf16> to vector<16x256xbf16>
    %c80_94 = arith.constant 80 : index
    %c256_95 = arith.constant 256 : index
    %109 = vector.load %arg11[%c80_94, %c256_95] : memref<152x512xbf16, #tpu.memory_space<vmem>>, vector<16x256xbf16>
    tpu.vector_store %arg11[%c80_94, %c256_95], %108 {strides = array<i32>} : memref<152x512xbf16, #tpu.memory_space<vmem>>, vector<16x256xbf16>,
    %c0_96 = arith.constant 0 : index
    %c0_97 = arith.constant 0 : index
    %c143 = arith.constant 143 : index
    %110 = vector.load %arg10[%c0_96, %c0_97, %c143] : memref<2x16x512xbf16, #tpu.memory_space<vmem>>, vector<1x16x256xbf16>
    %111 = vector.shape_cast %110 : vector<1x16x256xbf16> to vector<16x256xbf16>
    %c96 = arith.constant 96 : index
    %c0_98 = arith.constant 0 : index
    %112 = vector.load %arg11[%c96, %c0_98] : memref<152x512xbf16, #tpu.memory_space<vmem>>, vector<16x256xbf16>
    tpu.vector_store %arg11[%c96, %c0_98], %111 {strides = array<i32>} : memref<152x512xbf16, #tpu.memory_space<vmem>>, vector<16x256xbf16>,
    %c1_99 = arith.constant 1 : index
    %c0_100 = arith.constant 0 : index
    %c143_101 = arith.constant 143 : index
    %113 = vector.load %arg10[%c1_99, %c0_100, %c143_101] : memref<2x16x512xbf16, #tpu.memory_space<vmem>>, vector<1x16x256xbf16>
    %114 = vector.shape_cast %113 : vector<1x16x256xbf16> to vector<16x256xbf16>
    %c96_102 = arith.constant 96 : index
    %c256_103 = arith.constant 256 : index
    %115 = vector.load %arg11[%c96_102, %c256_103] : memref<152x512xbf16, #tpu.memory_space<vmem>>, vector<16x256xbf16>
    tpu.vector_store %arg11[%c96_102, %c256_103], %114 {strides = array<i32>} : memref<152x512xbf16, #tpu.memory_space<vmem>>, vector<16x256xbf16>,
    %c0_104 = arith.constant 0 : index
    %c0_105 = arith.constant 0 : index
    %c144 = arith.constant 144 : index
    %116 = vector.load %arg8[%c0_104, %c0_105, %c144] : memref<2x16x512xbf16, #tpu.memory_space<vmem>>, vector<1x16x256xbf16>
    %117 = vector.shape_cast %116 : vector<1x16x256xbf16> to vector<16x256xbf16>
    %c112_106 = arith.constant 112 : index
    %c0_107 = arith.constant 0 : index
    %118 = vector.load %arg11[%c112_106, %c0_107] : memref<152x512xbf16, #tpu.memory_space<vmem>>, vector<16x256xbf16>
    tpu.vector_store %arg11[%c112_106, %c0_107], %117 {strides = array<i32>} : memref<152x512xbf16, #tpu.memory_space<vmem>>, vector<16x256xbf16>,
    %c1_108 = arith.constant 1 : index
    %c0_109 = arith.constant 0 : index
    %c144_110 = arith.constant 144 : index
    %119 = vector.load %arg8[%c1_108, %c0_109, %c144_110] : memref<2x16x512xbf16, #tpu.memory_space<vmem>>, vector<1x16x256xbf16>
    %120 = vector.shape_cast %119 : vector<1x16x256xbf16> to vector<16x256xbf16>
    %c112_111 = arith.constant 112 : index
    %c256_112 = arith.constant 256 : index
    %121 = vector.load %arg11[%c112_111, %c256_112] : memref<152x512xbf16, #tpu.memory_space<vmem>>, vector<16x256xbf16>
    tpu.vector_store %arg11[%c112_111, %c256_112], %120 {strides = array<i32>} : memref<152x512xbf16, #tpu.memory_space<vmem>>, vector<16x256xbf16>,
    %c0_113 = arith.constant 0 : index
    %c0_114 = arith.constant 0 : index
    %c145 = arith.constant 145 : index
    %122 = vector.load %arg9[%c0_113, %c0_114, %c145] : memref<2x16x512xbf16, #tpu.memory_space<vmem>>, vector<1x16x256xbf16>
    %123 = vector.shape_cast %122 : vector<1x16x256xbf16> to vector<16x256xbf16>
    %c128_115 = arith.constant 128 : index
    %c0_116 = arith.constant 0 : index
    %124 = vector.load %arg11[%c128_115, %c0_116] : memref<152x512xbf16, #tpu.memory_space<vmem>>, vector<16x256xbf16>
    tpu.vector_store %arg11[%c128_115, %c0_116], %123 {strides = array<i32>} : memref<152x512xbf16, #tpu.memory_space<vmem>>, vector<16x256xbf16>,
    %c1_117 = arith.constant 1 : index
    %c0_118 = arith.constant 0 : index
    %c145_119 = arith.constant 145 : index
    %125 = vector.load %arg9[%c1_117, %c0_118, %c145_119] : memref<2x16x512xbf16, #tpu.memory_space<vmem>>, vector<1x16x256xbf16>
    %126 = vector.shape_cast %125 : vector<1x16x256xbf16> to vector<16x256xbf16>
    %c128_120 = arith.constant 128 : index
    %c256_121 = arith.constant 256 : index
    %127 = vector.load %arg11[%c128_120, %c256_121] : memref<152x512xbf16, #tpu.memory_space<vmem>>, vector<16x256xbf16>
    tpu.vector_store %arg11[%c128_120, %c256_121], %126 {strides = array<i32>} : memref<152x512xbf16, #tpu.memory_space<vmem>>, vector<16x256xbf16>,
    %c0_122 = arith.constant 0 : index
    %c0_123 = arith.constant 0 : index
    %128 = vector.load %arg5[%c0_122, %c0_123] : memref<32x152xbf16, #tpu.memory_space<vmem>>, vector<32x152xbf16>
    %c0_124 = arith.constant 0 : index
    %c0_125 = arith.constant 0 : index
    %129 = vector.load %arg11[%c0_124, %c0_125] : memref<152x512xbf16, #tpu.memory_space<vmem>>, vector<152x512xbf16>
    %cst_126 = arith.constant dense<0.000000e+00> : vector<32x512xf32>
    %130 = tpu.matmul %128, %129, %cst_126 {dimension_numbers = #tpu.dot_dimension_numbers<[1], [0], [0], [1], [0, 0, 1, 1], [], []>} : vector<32x152xbf16>, vector<152x512xbf16>, vector<32x512xf32> -> vector<32x512xf32>
    %131 = vector.extract_strided_slice %130 {offsets = [0, 0], sizes = [32, 256], strides = [1, 1]} : vector<32x512xf32> to vector<32x256xf32>
    %132 = vector.extract_strided_slice %131 {offsets = [0, 0], sizes = [8, 256], strides = [1, 1]} : vector<32x256xf32> to vector<8x256xf32>
    %cst_127 = arith.constant 5.000000e-01 : f32
    %133 = vector.broadcast %cst_127 : f32 to vector<8x256xf32>
    %134 = arith.mulf %133, %132 : vector<8x256xf32>
    %135 = math.tanh %134 : vector<8x256xf32>
    %cst_128 = arith.constant 5.000000e-01 : f32
    %136 = vector.broadcast %cst_128 : f32 to vector<8x256xf32>
    %137 = arith.mulf %136, %135 : vector<8x256xf32>
    %cst_129 = arith.constant 5.000000e-01 : f32
    %138 = vector.broadcast %cst_129 : f32 to vector<8x256xf32>
    %139 = arith.addf %137, %138 : vector<8x256xf32>
    %140 = vector.extract_strided_slice %131 {offsets = [8, 0], sizes = [8, 256], strides = [1, 1]} : vector<32x256xf32> to vector<8x256xf32>
    %cst_130 = arith.constant 5.000000e-01 : f32
    %141 = vector.broadcast %cst_130 : f32 to vector<8x256xf32>
    %142 = arith.mulf %141, %140 : vector<8x256xf32>
    %143 = math.tanh %142 : vector<8x256xf32>
    %cst_131 = arith.constant 5.000000e-01 : f32
    %144 = vector.broadcast %cst_131 : f32 to vector<8x256xf32>
    %145 = arith.mulf %144, %143 : vector<8x256xf32>
    %cst_132 = arith.constant 5.000000e-01 : f32
    %146 = vector.broadcast %cst_132 : f32 to vector<8x256xf32>
    %147 = arith.addf %145, %146 : vector<8x256xf32>
    %148 = vector.extract_strided_slice %131 {offsets = [16, 0], sizes = [8, 256], strides = [1, 1]} : vector<32x256xf32> to vector<8x256xf32>
    %cst_133 = arith.constant 5.000000e-01 : f32
    %149 = vector.broadcast %cst_133 : f32 to vector<8x256xf32>
    %150 = arith.mulf %149, %148 : vector<8x256xf32>
    %151 = math.tanh %150 : vector<8x256xf32>
    %cst_134 = arith.constant 5.000000e-01 : f32
    %152 = vector.broadcast %cst_134 : f32 to vector<8x256xf32>
    %153 = arith.mulf %152, %151 : vector<8x256xf32>
    %cst_135 = arith.constant 5.000000e-01 : f32
    %154 = vector.broadcast %cst_135 : f32 to vector<8x256xf32>
    %155 = arith.addf %153, %154 : vector<8x256xf32>
    %156 = vector.extract_strided_slice %131 {offsets = [24, 0], sizes = [8, 256], strides = [1, 1]} : vector<32x256xf32> to vector<8x256xf32>
    %157 = math.tanh %156 : vector<8x256xf32>
    %c0_136 = arith.constant 0 : index
    %c0_137 = arith.constant 0 : index
    %c0_138 = arith.constant 0 : index
    %158 = vector.load %arg7[%c0_136, %c0_137, %c0_138] : memref<2x8x256xf32, #tpu.memory_space<vmem>>, vector<1x8x256xf32>
    %159 = vector.shape_cast %158 : vector<1x8x256xf32> to vector<8x256xf32>
    %160 = arith.mulf %147, %159 : vector<8x256xf32>
    %161 = arith.mulf %139, %157 : vector<8x256xf32>
    %162 = arith.addf %160, %161 : vector<8x256xf32>
    %163 = math.tanh %162 : vector<8x256xf32>
    %164 = arith.mulf %155, %163 : vector<8x256xf32>
    %c0_139 = arith.constant 0 : index
    %c0_140 = arith.constant 0 : index
    %c0_141 = arith.constant 0 : index
    %165 = vector.load %arg7[%c0_139, %c0_140, %c0_141] : memref<2x8x256xf32, #tpu.memory_space<vmem>>, vector<1x8x256xf32>
    %166 = vector.shape_cast %165 : vector<1x8x256xf32> to vector<8x256xf32>
    %167 = vector.shape_cast %162 : vector<8x256xf32> to vector<1x8x256xf32>
    tpu.vector_store %arg7[%c0_139, %c0_140, %c0_141], %167 {strides = array<i32>} : memref<2x8x256xf32, #tpu.memory_space<vmem>>, vector<1x8x256xf32>,
    %168 = arith.truncf %164 : vector<8x256xf32> to vector<8x256xbf16>
    %c0_142 = arith.constant 0 : index
    %c0_143 = arith.constant 0 : index
    %c0_144 = arith.constant 0 : index
    %169 = vector.load %arg6[%c0_142, %c0_143, %c0_144] : memref<2x8x256xbf16, #tpu.memory_space<vmem>>, vector<1x8x256xbf16>
    %170 = vector.shape_cast %169 : vector<1x8x256xbf16> to vector<8x256xbf16>
    %171 = vector.shape_cast %168 : vector<8x256xbf16> to vector<1x8x256xbf16>
    tpu.vector_store %arg6[%c0_142, %c0_143, %c0_144], %171 {strides = array<i32>} : memref<2x8x256xbf16, #tpu.memory_space<vmem>>, vector<1x8x256xbf16>,
    %172 = vector.extract_strided_slice %130 {offsets = [0, 256], sizes = [32, 256], strides = [1, 1]} : vector<32x512xf32> to vector<32x256xf32>
    %173 = vector.extract_strided_slice %172 {offsets = [0, 0], sizes = [8, 256], strides = [1, 1]} : vector<32x256xf32> to vector<8x256xf32>
    %cst_145 = arith.constant 5.000000e-01 : f32
    %174 = vector.broadcast %cst_145 : f32 to vector<8x256xf32>
    %175 = arith.mulf %174, %173 : vector<8x256xf32>
    %176 = math.tanh %175 : vector<8x256xf32>
    %cst_146 = arith.constant 5.000000e-01 : f32
    %177 = vector.broadcast %cst_146 : f32 to vector<8x256xf32>
    %178 = arith.mulf %177, %176 : vector<8x256xf32>
    %cst_147 = arith.constant 5.000000e-01 : f32
    %179 = vector.broadcast %cst_147 : f32 to vector<8x256xf32>
    %180 = arith.addf %178, %179 : vector<8x256xf32>
    %181 = vector.extract_strided_slice %172 {offsets = [8, 0], sizes = [8, 256], strides = [1, 1]} : vector<32x256xf32> to vector<8x256xf32>
    %cst_148 = arith.constant 5.000000e-01 : f32
    %182 = vector.broadcast %cst_148 : f32 to vector<8x256xf32>
    %183 = arith.mulf %182, %181 : vector<8x256xf32>
    %184 = math.tanh %183 : vector<8x256xf32>
    %cst_149 = arith.constant 5.000000e-01 : f32
    %185 = vector.broadcast %cst_149 : f32 to vector<8x256xf32>
    %186 = arith.mulf %185, %184 : vector<8x256xf32>
    %cst_150 = arith.constant 5.000000e-01 : f32
    %187 = vector.broadcast %cst_150 : f32 to vector<8x256xf32>
    %188 = arith.addf %186, %187 : vector<8x256xf32>
    %189 = vector.extract_strided_slice %172 {offsets = [16, 0], sizes = [8, 256], strides = [1, 1]} : vector<32x256xf32> to vector<8x256xf32>
    %cst_151 = arith.constant 5.000000e-01 : f32
    %190 = vector.broadcast %cst_151 : f32 to vector<8x256xf32>
    %191 = arith.mulf %190, %189 : vector<8x256xf32>
    %192 = math.tanh %191 : vector<8x256xf32>
    %cst_152 = arith.constant 5.000000e-01 : f32
    %193 = vector.broadcast %cst_152 : f32 to vector<8x256xf32>
    %194 = arith.mulf %193, %192 : vector<8x256xf32>
    %cst_153 = arith.constant 5.000000e-01 : f32
    %195 = vector.broadcast %cst_153 : f32 to vector<8x256xf32>
    %196 = arith.addf %194, %195 : vector<8x256xf32>
    %197 = vector.extract_strided_slice %172 {offsets = [24, 0], sizes = [8, 256], strides = [1, 1]} : vector<32x256xf32> to vector<8x256xf32>
    %198 = math.tanh %197 : vector<8x256xf32>
    %c1_154 = arith.constant 1 : index
    %c0_155 = arith.constant 0 : index
    %c0_156 = arith.constant 0 : index
    %199 = vector.load %arg7[%c1_154, %c0_155, %c0_156] : memref<2x8x256xf32, #tpu.memory_space<vmem>>, vector<1x8x256xf32>
    %200 = vector.shape_cast %199 : vector<1x8x256xf32> to vector<8x256xf32>
    %201 = arith.mulf %188, %200 : vector<8x256xf32>
    %202 = arith.mulf %180, %198 : vector<8x256xf32>
    %203 = arith.addf %201, %202 : vector<8x256xf32>
    %204 = math.tanh %203 : vector<8x256xf32>
    %205 = arith.mulf %196, %204 : vector<8x256xf32>
    %c1_157 = arith.constant 1 : index
    %c0_158 = arith.constant 0 : index
    %c0_159 = arith.constant 0 : index
    %206 = vector.load %arg7[%c1_157, %c0_158, %c0_159] : memref<2x8x256xf32, #tpu.memory_space<vmem>>, vector<1x8x256xf32>
    %207 = vector.shape_cast %206 : vector<1x8x256xf32> to vector<8x256xf32>
    %208 = vector.shape_cast %203 : vector<8x256xf32> to vector<1x8x256xf32>
    tpu.vector_store %arg7[%c1_157, %c0_158, %c0_159], %208 {strides = array<i32>} : memref<2x8x256xf32, #tpu.memory_space<vmem>>, vector<1x8x256xf32>,
    %209 = arith.truncf %205 : vector<8x256xf32> to vector<8x256xbf16>
    %c1_160 = arith.constant 1 : index
    %c0_161 = arith.constant 0 : index
    %c0_162 = arith.constant 0 : index
    %210 = vector.load %arg6[%c1_160, %c0_161, %c0_162] : memref<2x8x256xbf16, #tpu.memory_space<vmem>>, vector<1x8x256xbf16>
    %211 = vector.shape_cast %210 : vector<1x8x256xbf16> to vector<8x256xbf16>
    %212 = vector.shape_cast %209 : vector<8x256xbf16> to vector<1x8x256xbf16>
    tpu.vector_store %arg6[%c1_160, %c0_161, %c0_162], %212 {strides = array<i32>} : memref<2x8x256xbf16, #tpu.memory_space<vmem>>, vector<1x8x256xbf16>,
    return
  }
  func.func @transform_0(%arg0: i32, %arg1: i32) -> (i32, i32, i32, i32) {
    %c0_i32 = arith.constant 0 : i32
    %c0_i32_0 = arith.constant 0 : i32
    %c0_i32_1 = arith.constant 0 : i32
    return %arg1, %arg0, %c0_i32, %c0_i32_0 : i32, i32, i32, i32
  }
  func.func @transform_1(%arg0: i32, %arg1: i32) -> (i32, i32, i32) {
    %c0_i32 = arith.constant 0 : i32
    %c0_i32_0 = arith.constant 0 : i32
    %c0_i32_1 = arith.constant 0 : i32
    return %arg0, %c0_i32, %c0_i32_0 : i32, i32, i32
  }
  func.func @transform_2(%arg0: i32, %arg1: i32) -> (i32, i32, i32) {
    %c0_i32 = arith.constant 0 : i32
    %c0_i32_0 = arith.constant 0 : i32
    %c0_i32_1 = arith.constant 0 : i32
    return %arg0, %c0_i32, %c0_i32_0 : i32, i32, i32
  }
  func.func @transform_3(%arg0: i32, %arg1: i32) -> (i32, i32) {
    %c0_i32 = arith.constant 0 : i32
    %c0_i32_0 = arith.constant 0 : i32
    %c0_i32_1 = arith.constant 0 : i32
    return %c0_i32, %c0_i32_0 : i32, i32
  }
  func.func @transform_4(%arg0: i32, %arg1: i32) -> (i32, i32, i32) {
    %c0_i32 = arith.constant 0 : i32
    %c0_i32_0 = arith.constant 0 : i32
    %c0_i32_1 = arith.constant 0 : i32
    return %arg0, %c0_i32, %c0_i32_0 : i32, i32, i32
  }
  func.func @transform_5(%arg0: i32, %arg1: i32) -> (i32, i32, i32) {
    %c0_i32 = arith.constant 0 : i32
    %c0_i32_0 = arith.constant 0 : i32
    %c0_i32_1 = arith.constant 0 : i32
    return %arg0, %c0_i32, %c0_i32_0 : i32, i32, i32
  }
}

</mosaic_0001>

<llo_original>
// kernel: tpu_custom_call.1
$region0: #{tpu_custom_call.1}
  #allocation0 [shape = 'u32[]', space=smem, size = 0x4, offset = 0x4, fixed_abs, tag = 'smem constant byte address 0x4 - core index']
  #allocation1 [shape = 'u32[144,128]{1,0:T(1,128)}', space=vmem, size = 0x12000, scoped, tag = 'internal scratch']
  #allocation2 [shape = 'bf16[2,16,512]{2,1,0:T(16,128)(2,1)}', space=vmem, size = 0x8000, scoped, tag = 'scratch operand']
  #allocation3 [shape = 'bf16[2,16,512]{2,1,0:T(16,128)(2,1)}', space=vmem, size = 0x8000, scoped, tag = 'scratch operand']
  #allocation4 [shape = 'bf16[2,16,512]{2,1,0:T(16,128)(2,1)}', space=vmem, size = 0x8000, scoped, tag = 'scratch operand']
  #allocation5 [shape = 'bf16[152,512]{1,0:T(8,128)(2,1)}', space=vmem, size = 0x26000, scoped, tag = 'scratch operand']
  %s0 = inlined_call_operand.vmem [shape: bf16[1,2,4,256], index: 0, kind: input, shape index: {}]
  %s1 = inlined_call_operand.vmem [shape: bf16[2,8,256], index: 1, kind: input, shape index: {}]
  %s2 = inlined_call_operand.hbm [shape: f32[2,8,256], index: 2, kind: input, shape index: {}, may-alias: {2,5}]
  %s3 = inlined_call_operand.vmem [shape: bf16[32,152], index: 3, kind: input, shape index: {}]
  %s4 = inlined_call_operand.hbm [shape: bf16[2,8,256], index: 4, kind: output, shape index: {0}]
  %s5 = inlined_call_operand.hbm [shape: f32[2,8,256], index: 5, kind: output, shape index: {1}, may-alias: {2,5}]
  %6 = xla_tuple %s4, %s5
  %s7 = sld [smem:[#allocation0]]
  $region42: #{tpu_custom_call.1} parent=0
    _
  %s9 = ssub.s32 1, %s7
  %s10 = scalar_select 0, %s9, %s7
  $region1: #{tpu_custom_call.1} parent=0
    #allocation6 [shape = 'u8[16384]{0}', space=vmem, size = 0x4000, scoped, tag = 'input window, operand 2, single buffered']
    #allocation7 [shape = 's32[1]{0}', space=sflag, size = 0x4, scoped, tag = 'scoped memory for tpu_custom_call.1']
    #allocation8 [shape = 's32[1]{0}', space=sflag, size = 0x4, scoped, tag = 'scoped memory for tpu_custom_call.1']
    #allocation9 [shape = 'u8[8192]{0}', space=vmem, size = 0x2000, scoped, tag = 'output window, operand 0, single buffered']
    #allocation10 [shape = 'u8[16384]{0}', space=vmem, size = 0x4000, scoped, tag = 'output window, operand 1, single buffered']
    #allocation11 [shape = 's32[1]{0}', space=sflag, size = 0x4, scoped, tag = 'scoped memory for tpu_custom_call.1']
    %11 = vsyncpa [#allocation7], 0
    %12 = vsyncpa [#allocation8], 0
    %13 = vsyncpa [#allocation11], 0
    // Predicated region
    $region2: #{tpu_custom_call.1} parent=1 // pred_check
      _
    $region3: #{tpu_custom_call.1} parent=1 // pred_check_branch
      %15 = sbr.rel (0) target = $region5
    $region4: #{tpu_custom_call.1} parent=1 // pred_region
      _
    $region5: #{tpu_custom_call.1} parent=1 // pred_fallthru
      _
    // Predicated region
    $region6: #{tpu_custom_call.1} parent=1 // pred_check
      _
    $region7: #{tpu_custom_call.1} parent=1 // pred_check_branch
      %17 = sbr.rel (0) target = $region9
    $region8: #{tpu_custom_call.1} parent=1 // pred_region
      _
    $region9: #{tpu_custom_call.1} parent=1 // pred_fallthru
      _
    // Predicated region
    $region10: #{tpu_custom_call.1} parent=1 // pred_check
      _
    $region11: #{tpu_custom_call.1} parent=1 // pred_check_branch
      %19 = sbr.rel (0) target = $region13
    $region12: #{tpu_custom_call.1} parent=1 // pred_region
      %s21 = ssub.s32 512, 512
      %22 = vsyncadd [#allocation7], %s21
      %s23 = sshll.u32 [#allocation6], 4
      %s24 = int_to_ptr.vmem [resolvable:$true] %s23
      %29 = dma.hbm_to_vmem [thread:$0]  %s2, 512, %s24, [#allocation7], 256, 256, 16
    $region13: #{tpu_custom_call.1} parent=1 // pred_fallthru
      _
    // Predicated region
    $region14: #{tpu_custom_call.1} parent=1 // pred_check
      _
    $region15: #{tpu_custom_call.1} parent=1 // pred_check_branch
      %31 = sbr.rel (0) target = $region17
    $region16: #{tpu_custom_call.1} parent=1 // pred_region
      _
    $region17: #{tpu_custom_call.1} parent=1 // pred_fallthru
      _
    // Predicated region
    $region18: #{tpu_custom_call.1} parent=1 // pred_check
      _
    $region19: #{tpu_custom_call.1} parent=1 // pred_check_branch
      %33 = sbr.rel (0) target = $region21
    $region20: #{tpu_custom_call.1} parent=1 // pred_region
      %34 = dma.done [#allocation7], 512
    $region21: #{tpu_custom_call.1} parent=1 // pred_fallthru
      _
    %p39 = scmp.eq.s32.totalorder 0, 0
    // Predicated region
    $region22: #{tpu_custom_call.1} parent=1 // pred_check
      %p40 = pneg %p39
    $region23: #{tpu_custom_call.1} parent=1 // pred_check_branch
      %42 = sbr.rel (%p40) target = $region25
    $region24: #{tpu_custom_call.1} parent=1 // pred_region
      %43 = vst [vmem:[#allocation2] sm:$0xff] 0
      %44 = vst [vmem:[#allocation2 + $0x8] sm:$0xff] 0
      %45 = vst [vmem:[#allocation2 + $0x10] sm:$0xff] 0
      %46 = vst [vmem:[#allocation2 + $0x18] sm:$0xff] 0
      %47 = vst [vmem:[#allocation2 + $0x20] sm:$0xff] 0
      %48 = vst [vmem:[#allocation2 + $0x28] sm:$0xff] 0
      %49 = vst [vmem:[#allocation2 + $0x30] sm:$0xff] 0
      %50 = vst [vmem:[#allocation2 + $0x38] sm:$0xff] 0
      %51 = vst [vmem:[#allocation3] sm:$0xff] 0
      %52 = vst [vmem:[#allocation3 + $0x8] sm:$0xff] 0
      %53 = vst [vmem:[#allocation3 + $0x10] sm:$0xff] 0
      %54 = vst [vmem:[#allocation3 + $0x18] sm:$0xff] 0
      %55 = vst [vmem:[#allocation3 + $0x20] sm:$0xff] 0
      %56 = vst [vmem:[#allocation3 + $0x28] sm:$0xff] 0
      %57 = vst [vmem:[#allocation3 + $0x30] sm:$0xff] 0
      %58 = vst [vmem:[#allocation3 + $0x38] sm:$0xff] 0
      %59 = vst [vmem:[#allocation4] sm:$0xff] 0
      %60 = vst [vmem:[#allocation4 + $0x8] sm:$0xff] 0
      %61 = vst [vmem:[#allocation4 + $0x10] sm:$0xff] 0
      %62 = vst [vmem:[#allocation4 + $0x18] sm:$0xff] 0
      %63 = vst [vmem:[#allocation4 + $0x20] sm:$0xff] 0
      %64 = vst [vmem:[#allocation4 + $0x28] sm:$0xff] 0
      %65 = vst [vmem:[#allocation4 + $0x30] sm:$0xff] 0
      %66 = vst [vmem:[#allocation4 + $0x38] sm:$0xff] 0
      %67 = vst [vmem:[#allocation5 + $0x120] sm:$0xff] 1065369472
      %68 = vst [vmem:[#allocation5 + $0x128] sm:$0xff] 1065369472
      %v69 = vld [vmem:[%s1] sm:$0xff]
      %v70 = vld [vmem:[%s1 + $0x8] sm:$0xff]
      %71 = vst [vmem:[#allocation9] sm:$0xff] %v69
      %72 = vst [vmem:[#allocation9 + $0x8] sm:$0xff] %v70
      %v73 = vld [vmem:[#allocation6] sm:$0xff]
      %v74 = vld [vmem:[#allocation6 + $0x8] sm:$0xff]
      %v75 = vld [vmem:[#allocation6 + $0x10] sm:$0xff]
      %v76 = vld [vmem:[#allocation6 + $0x18] sm:$0xff]
      %77 = vst [vmem:[#allocation10] sm:$0xff] %v73
      %78 = vst [vmem:[#allocation10 + $0x8] sm:$0xff] %v74
      %79 = vst [vmem:[#allocation10 + $0x10] sm:$0xff] %v75
      %80 = vst [vmem:[#allocation10 + $0x18] sm:$0xff] %v76
    $region25: #{tpu_custom_call.1} parent=1 // pred_fallthru
      _
    %v81 = vlaneseq
    %v82 = vand.u32 %v81, 127
    %v83 = vadd.s32 %v82, 128
    %vm84 = vcmp.lt.s32.totalorder %v82, 0
    %v85 = vsub.s32 0, %v82
    %v86 = vsel %vm84, %v85, %v82
    %v87 = vshrl.u32 %v86, 4
    %v88 = vand.u32 %v86, 15
    %v89 = vsub.s32 0, %v88
    %v90 = vsel %vm84, %v89, %v88
    %vm91 = vcmp.lt.s32.totalorder %v83, 0
    %v92 = vsub.s32 0, %v83
    %v93 = vsel %vm91, %v92, %v83
    %v94 = vshrl.u32 %v93, 4
    %v95 = vand.u32 %v93, 15
    %v96 = vsub.s32 0, %v95
    %v97 = vsel %vm91, %v96, %v95
    %vm98 = vcmp.ne.s32.totalorder %v90, 0
    %vm99 = vcmp.ne.s32.totalorder %v97, 0
    %vm100 = vcmp.lt.s32.totalorder %v90, 0
    %vm101 = vcmp.lt.s32.totalorder %v97, 0
    %vm102 = vmand %vm100, %vm98
    %vm103 = vmand %vm101, %vm99
    %v104 = vadd.s32 %v90, 16
    %v105 = vadd.s32 %v97, 16
    %v106 = vsel %vm102, %v104, %v90
    %v107 = vsel %vm103, %v105, %v97
    %vm108 = vcmp.ne.s32.totalorder %v106, 0
    %vm109 = vcmp.ne.s32.totalorder %v107, 0
    %vm110 = vcmp.ne.s32.totalorder %v106, 15
    %vm111 = vcmp.ne.s32.totalorder %v107, 15
    %v112 = vld [vmem:[%s0] sm:$0xf]
    %v115 = vunpack.c.l.s4 1983009808
    %v116 = vunpack.c.0.s8 %v115
    %v117 = vlaneseq
    %v118 = vshrl.u32 %v117, 7
    %v119 = vsub.s32 %v116, %v118
    %v120 = vrot.slane %v112, %v119
    %v121 = vcombine.high %v120, %v120
    %124 = vst [vmem:[#allocation2 + $0x8] sm:$0x3] %v120
    %125 = vst [vmem:[#allocation2 + $0x10] sm:$0x3] %v121
    %v126 = vld [vmem:[#allocation9] sm:$0xff]
    %v128 = vunpack.c.l.b16 %v126
    %v129 = vunpack.c.h.b16 %v126
    %v130 = vpack.c.b16 %v128, %v128
    %v131 = vpack.c.b16 %v129, %v129
    %134 = vst [vmem:[#allocation2 + $0x8] sm:$0xf0] %v130
    %135 = vst [vmem:[#allocation2 + $0x10] sm:$0xf0] %v131
    %v136 = vld [vmem:[#allocation2 + $0x8] sm:$0xff]
    %v137 = vld [vmem:[#allocation2 + $0x10] sm:$0xff]
    %v138 = vsel %vm108, 1, 0
    %v139 = vsel %vm109, 1, 0
    %vm140 = vcmp.eq.s32.totalorder %v138, 1
    %vm141 = vcmp.eq.s32.totalorder %v139, 1
    %vm142 = vmpackc.low %vm141, %vm140
    %v143 = vsel %vm142, 65537, 0
    %v144 = vlaneseq
    %v145 = vshrl.u32 %v144, 7
    %v146 = vsub.s32 0, %v145
    %v147 = vrot.slane %v143, %v146
    %v148 = vlaneseq
    %v149 = vshrl.u32 %v148, 7
    %v150 = vsub.s32 4, %v149
    %v151 = vrot.slane %v143, %v150
    %vm152 = vcmp.ne.s16.totalorder %v147, 0
    %vm153 = vcmp.ne.s16.totalorder %v151, 0
    %v154 = vsel %vm152, %v136, 0
    %v155 = vsel %vm153, %v137, 0
    %156 = vst [vmem:[#allocation3 + $0x8] sm:$0xff] %v154
    %157 = vst [vmem:[#allocation3 + $0x10] sm:$0xff] %v155
    %v158 = vsel %vm110, 1, 0
    %v159 = vsel %vm111, 1, 0
    %vm160 = vcmp.eq.s32.totalorder %v158, 1
    %vm161 = vcmp.eq.s32.totalorder %v159, 1
    %vm162 = vmpackc.low %vm161, %vm160
    %v163 = vsel %vm162, 65537, 0
    %v164 = vlaneseq
    %v165 = vshrl.u32 %v164, 7
    %v166 = vsub.s32 0, %v165
    %v167 = vrot.slane %v163, %v166
    %v168 = vlaneseq
    %v169 = vshrl.u32 %v168, 7
    %v170 = vsub.s32 4, %v169
    %v171 = vrot.slane %v163, %v170
    %vm172 = vcmp.ne.s16.totalorder %v167, 0
    %vm173 = vcmp.ne.s16.totalorder %v171, 0
    %v174 = vsel %vm172, %v136, 0
    %v175 = vsel %vm173, %v137, 0
    %176 = vst [vmem:[#allocation4 + $0x8] sm:$0xff] %v174
    %177 = vst [vmem:[#allocation4 + $0x10] sm:$0xff] %v175
    %s178 = scalar_lea.vmem %s0, 4
    %v179 = vld [vmem:[%s178] sm:$0xf]
    %v182 = vunpack.c.l.s4 1983009808
    %v183 = vunpack.c.0.s8 %v182
    %v184 = vlaneseq
    %v185 = vshrl.u32 %v184, 7
    %v186 = vsub.s32 %v183, %v185
    %v187 = vrot.slane %v179, %v186
    %v188 = vcombine.high %v187, %v187
    %s191 = scalar_lea.vmem [#allocation2], 32
    %192 = vst [vmem:[%s191 + $0x8] sm:$0x3] %v187
    %193 = vst [vmem:[%s191 + $0x10] sm:$0x3] %v188
    %s194 = scalar_lea.vmem [#allocation9], 8
    %v195 = vld [vmem:[%s194] sm:$0xff]
    %v197 = vunpack.c.l.b16 %v195
    %v198 = vunpack.c.h.b16 %v195
    %v199 = vpack.c.b16 %v197, %v197
    %v200 = vpack.c.b16 %v198, %v198
    %203 = vst [vmem:[%s191 + $0x8] sm:$0xf0] %v199
    %204 = vst [vmem:[%s191 + $0x10] sm:$0xf0] %v200
    %v205 = vld [vmem:[%s191 + $0x8] sm:$0xff]
    %v206 = vld [vmem:[%s191 + $0x10] sm:$0xff]
    %v207 = vsel %vm152, %v205, 0
    %v208 = vsel %vm153, %v206, 0
    %s209 = scalar_lea.vmem [#allocation3], 32
    %210 = vst [vmem:[%s209 + $0x8] sm:$0xff] %v207
    %211 = vst [vmem:[%s209 + $0x10] sm:$0xff] %v208
    %v212 = vsel %vm172, %v205, 0
    %v213 = vsel %vm173, %v206, 0
    %s214 = scalar_lea.vmem [#allocation4], 32
    %215 = vst [vmem:[%s214 + $0x8] sm:$0xff] %v212
    %216 = vst [vmem:[%s214 + $0x10] sm:$0xff] %v213
    %v217 = vld [vmem:[#allocation4] sm:$0xff]
    %v218 = vld [vmem:[#allocation4 + $0x8] sm:$0xff]
    %v219 = vld [vmem:[#allocation4 + $0x10] sm:$0xff]
    %v223 = vunpack.c.l.b16 %v217
    %v224 = vunpack.c.l.b16 %v218
    %v225 = vunpack.c.l.b16 %v219
    %v226 = vunpack.c.h.b16 %v217
    %v227 = vunpack.c.h.b16 %v218
    %v228 = vunpack.c.h.b16 %v219
    %v229 = vpack.c.b16 %v224, %v223
    %v230 = vpack.c.b16 %v225, %v225
    %v231 = vpack.c.b16 %v227, %v226
    %v232 = vpack.c.b16 %v228, %v228
    %233 = vrot.lane.b32.xlu0 %v229, 17
    %v234 = vpop.permute.xlu0 %233
    %235 = vrot.lane.b32.xlu0 %v230, 17
    %v236 = vpop.permute.xlu0 %235
    %237 = vrot.lane.b32.xlu0 %v231, 17
    %v238 = vpop.permute.xlu0 %237
    %239 = vrot.lane.b32.xlu0 %v232, 17
    %v240 = vpop.permute.xlu0 %239
    %v241 = vrot.slane %v234, 4
    %v242 = vrot.slane %v236, 4
    %v243 = vrot.slane %v238, 4
    %v244 = vrot.slane %v240, 4
    %vm245 = vcmask 1043456
    %v246 = vsel %vm245, %v241, %v242
    %vm247 = vcmask 138240
    %v248 = vsel %vm247, %v234, %v246
    %v249 = vsel %vm245, %v243, %v244
    %v250 = vsel %vm247, %v238, %v249
    %253 = vst [vmem:[#allocation5] sm:$0xff] %v248
    %254 = vst [vmem:[#allocation5 + $0x10] sm:$0xff] %v250
    %v255 = vld [vmem:[%s214] sm:$0xff]
    %v256 = vld [vmem:[%s214 + $0x8] sm:$0xff]
    %v257 = vld [vmem:[%s214 + $0x10] sm:$0xff]
    %v261 = vunpack.c.l.b16 %v255
    %v262 = vunpack.c.l.b16 %v256
    %v263 = vunpack.c.l.b16 %v257
    %v264 = vunpack.c.h.b16 %v255
    %v265 = vunpack.c.h.b16 %v256
    %v266 = vunpack.c.h.b16 %v257
    %v267 = vpack.c.b16 %v262, %v261
    %v268 = vpack.c.b16 %v263, %v263
    %v269 = vpack.c.b16 %v265, %v264
    %v270 = vpack.c.b16 %v266, %v266
    %271 = vrot.lane.b32.xlu0 %v267, 17
    %v272 = vpop.permute.xlu0 %271
    %273 = vrot.lane.b32.xlu0 %v268, 17
    %v274 = vpop.permute.xlu0 %273
    %275 = vrot.lane.b32.xlu0 %v269, 17
    %v276 = vpop.permute.xlu0 %275
    %277 = vrot.lane.b32.xlu0 %v270, 17
    %v278 = vpop.permute.xlu0 %277
    %v279 = vrot.slane %v272, 4
    %v280 = vrot.slane %v274, 4
    %v281 = vrot.slane %v276, 4
    %v282 = vrot.slane %v278, 4
    %v283 = vsel %vm245, %v279, %v280
    %v284 = vsel %vm247, %v272, %v283
    %v285 = vsel %vm245, %v281, %v282
    %v286 = vsel %vm247, %v276, %v285
    %289 = vst [vmem:[#allocation5 + $0x8] sm:$0xff] %v284
    %290 = vst [vmem:[#allocation5 + $0x18] sm:$0xff] %v286
    %v291 = vld [vmem:[#allocation2] sm:$0xff]
    %v292 = vld [vmem:[#allocation2 + $0x8] sm:$0xff]
    %v293 = vld [vmem:[#allocation2 + $0x10] sm:$0xff]
    %v297 = vunpack.c.l.b16 %v291
    %v298 = vunpack.c.l.b16 %v292
    %v299 = vunpack.c.l.b16 %v293
    %v300 = vunpack.c.h.b16 %v291
    %v301 = vunpack.c.h.b16 %v292
    %v302 = vunpack.c.h.b16 %v293
    %v303 = vpack.c.b16 %v298, %v297
    %v304 = vpack.c.b16 %v299, %v299
    %v305 = vpack.c.b16 %v301, %v300
    %v306 = vpack.c.b16 %v302, %v302
    %307 = vrot.lane.b32.xlu0 %v303, 16
    %v308 = vpop.permute.xlu0 %307
    %309 = vrot.lane.b32.xlu0 %v304, 16
    %v310 = vpop.permute.xlu0 %309
    %311 = vrot.lane.b32.xlu0 %v305, 16
    %v312 = vpop.permute.xlu0 %311
    %313 = vrot.lane.b32.xlu0 %v306, 16
    %v314 = vpop.permute.xlu0 %313
    %v315 = vrot.slane %v308, 4
    %v316 = vrot.slane %v310, 4
    %v317 = vrot.slane %v312, 4
    %v318 = vrot.slane %v314, 4
    %v319 = vsel %vm245, %v315, %v316
    %vm320 = vcmask 130048
    %v321 = vsel %vm320, %v308, %v319
    %v322 = vsel %vm245, %v317, %v318
    %v323 = vsel %vm320, %v312, %v322
    %326 = vst [vmem:[#allocation5 + $0x20] sm:$0xff] %v321
    %327 = vst [vmem:[#allocation5 + $0x30] sm:$0xff] %v323
    %v328 = vld [vmem:[%s191] sm:$0xff]
    %v329 = vld [vmem:[%s191 + $0x8] sm:$0xff]
    %v330 = vld [vmem:[%s191 + $0x10] sm:$0xff]
    %v334 = vunpack.c.l.b16 %v328
    %v335 = vunpack.c.l.b16 %v329
    %v336 = vunpack.c.l.b16 %v330
    %v337 = vunpack.c.h.b16 %v328
    %v338 = vunpack.c.h.b16 %v329
    %v339 = vunpack.c.h.b16 %v330
    %v340 = vpack.c.b16 %v335, %v334
    %v341 = vpack.c.b16 %v336, %v336
    %v342 = vpack.c.b16 %v338, %v337
    %v343 = vpack.c.b16 %v339, %v339
    %344 = vrot.lane.b32.xlu0 %v340, 16
    %v345 = vpop.permute.xlu0 %344
    %346 = vrot.lane.b32.xlu0 %v341, 16
    %v347 = vpop.permute.xlu0 %346
    %348 = vrot.lane.b32.xlu0 %v342, 16
    %v349 = vpop.permute.xlu0 %348
    %350 = vrot.lane.b32.xlu0 %v343, 16
    %v351 = vpop.permute.xlu0 %350
    %v352 = vrot.slane %v345, 4
    %v353 = vrot.slane %v347, 4
    %v354 = vrot.slane %v349, 4
    %v355 = vrot.slane %v351, 4
    %v356 = vsel %vm245, %v352, %v353
    %v357 = vsel %vm320, %v345, %v356
    %v358 = vsel %vm245, %v354, %v355
    %v359 = vsel %vm320, %v349, %v358
    %362 = vst [vmem:[#allocation5 + $0x28] sm:$0xff] %v357
    %363 = vst [vmem:[#allocation5 + $0x38] sm:$0xff] %v359
    %v364 = vld [vmem:[#allocation3] sm:$0xff]
    %v365 = vld [vmem:[#allocation3 + $0x8] sm:$0xff]
    %v366 = vld [vmem:[#allocation3 + $0x10] sm:$0xff]
    %v370 = vunpack.c.l.b16 %v364
    %v371 = vunpack.c.l.b16 %v365
    %v372 = vunpack.c.l.b16 %v366
    %v373 = vunpack.c.h.b16 %v364
    %v374 = vunpack.c.h.b16 %v365
    %v375 = vunpack.c.h.b16 %v366
    %v376 = vpack.c.b16 %v371, %v370
    %v377 = vpack.c.b16 %v372, %v372
    %v378 = vpack.c.b16 %v374, %v373
    %v379 = vpack.c.b16 %v375, %v375
    %380 = vrot.lane.b32.xlu0 %v376, 15
    %v381 = vpop.permute.xlu0 %380
    %382 = vrot.lane.b32.xlu0 %v377, 15
    %v383 = vpop.permute.xlu0 %382
    %384 = vrot.lane.b32.xlu0 %v378, 15
    %v385 = vpop.permute.xlu0 %384
    %386 = vrot.lane.b32.xlu0 %v379, 15
    %v387 = vpop.permute.xlu0 %386
    %v388 = vrot.slane %v381, 4
    %v389 = vrot.slane %v383, 4
    %v390 = vrot.slane %v385, 4
    %v391 = vrot.slane %v387, 4
    %v392 = vsel %vm245, %v388, %v389
    %vm393 = vcmask 121856
    %v394 = vsel %vm393, %v381, %v392
    %v395 = vsel %vm245, %v390, %v391
    %v396 = vsel %vm393, %v385, %v395
    %399 = vst [vmem:[#allocation5 + $0x40] sm:$0xff] %v394
    %400 = vst [vmem:[#allocation5 + $0x50] sm:$0xff] %v396
    %v401 = vld [vmem:[%s209] sm:$0xff]
    %v402 = vld [vmem:[%s209 + $0x8] sm:$0xff]
    %v403 = vld [vmem:[%s209 + $0x10] sm:$0xff]
    %v407 = vunpack.c.l.b16 %v401
    %v408 = vunpack.c.l.b16 %v402
    %v409 = vunpack.c.l.b16 %v403
    %v410 = vunpack.c.h.b16 %v401
    %v411 = vunpack.c.h.b16 %v402
    %v412 = vunpack.c.h.b16 %v403
    %v413 = vpack.c.b16 %v408, %v407
    %v414 = vpack.c.b16 %v409, %v409
    %v415 = vpack.c.b16 %v411, %v410
    %v416 = vpack.c.b16 %v412, %v412
    %417 = vrot.lane.b32.xlu0 %v413, 15
    %v418 = vpop.permute.xlu0 %417
    %419 = vrot.lane.b32.xlu0 %v414, 15
    %v420 = vpop.permute.xlu0 %419
    %421 = vrot.lane.b32.xlu0 %v415, 15
    %v422 = vpop.permute.xlu0 %421
    %423 = vrot.lane.b32.xlu0 %v416, 15
    %v424 = vpop.permute.xlu0 %423
    %v425 = vrot.slane %v418, 4
    %v426 = vrot.slane %v420, 4
    %v427 = vrot.slane %v422, 4
    %v428 = vrot.slane %v424, 4
    %v429 = vsel %vm245, %v425, %v426
    %v430 = vsel %vm393, %v418, %v429
    %v431 = vsel %vm245, %v427, %v428
    %v432 = vsel %vm393, %v422, %v431
    %435 = vst [vmem:[#allocation5 + $0x48] sm:$0xff] %v430
    %436 = vst [vmem:[#allocation5 + $0x58] sm:$0xff] %v432
    %v437 = vld [vmem:[#allocation4] sm:$0xff]
    %v438 = vld [vmem:[#allocation4 + $0x8] sm:$0xff]
    %v439 = vld [vmem:[#allocation4 + $0x10] sm:$0xff]
    %v443 = vunpack.c.l.b16 %v437
    %v444 = vunpack.c.l.b16 %v438
    %v445 = vunpack.c.l.b16 %v439
    %v446 = vunpack.c.h.b16 %v437
    %v447 = vunpack.c.h.b16 %v438
    %v448 = vunpack.c.h.b16 %v439
    %v449 = vpack.c.b16 %v444, %v443
    %v450 = vpack.c.b16 %v445, %v445
    %v451 = vpack.c.b16 %v447, %v446
    %v452 = vpack.c.b16 %v448, %v448
    %453 = vrot.lane.b32.xlu0 %v449, 1
    %v454 = vpop.permute.xlu0 %453
    %455 = vrot.lane.b32.xlu0 %v450, 1
    %v456 = vpop.permute.xlu0 %455
    %457 = vrot.lane.b32.xlu0 %v451, 1
    %v458 = vpop.permute.xlu0 %457
    %459 = vrot.lane.b32.xlu0 %v452, 1
    %v460 = vpop.permute.xlu0 %459
    %v461 = vrot.slane %v454, 4
    %v462 = vrot.slane %v456, 4
    %v463 = vrot.slane %v458, 4
    %v464 = vrot.slane %v460, 4
    %v465 = vsel %vm245, %v461, %v462
    %vm466 = vcmask 7168
    %v467 = vsel %vm466, %v454, %v465
    %v468 = vsel %vm245, %v463, %v464
    %v469 = vsel %vm466, %v458, %v468
    %472 = vst [vmem:[#allocation5 + $0x60] sm:$0xff] %v467
    %473 = vst [vmem:[#allocation5 + $0x70] sm:$0xff] %v469
    %v474 = vld [vmem:[%s214] sm:$0xff]
    %v475 = vld [vmem:[%s214 + $0x8] sm:$0xff]
    %v476 = vld [vmem:[%s214 + $0x10] sm:$0xff]
    %v480 = vunpack.c.l.b16 %v474
    %v481 = vunpack.c.l.b16 %v475
    %v482 = vunpack.c.l.b16 %v476
    %v483 = vunpack.c.h.b16 %v474
    %v484 = vunpack.c.h.b16 %v475
    %v485 = vunpack.c.h.b16 %v476
    %v486 = vpack.c.b16 %v481, %v480
    %v487 = vpack.c.b16 %v482, %v482
    %v488 = vpack.c.b16 %v484, %v483
    %v489 = vpack.c.b16 %v485, %v485
    %490 = vrot.lane.b32.xlu0 %v486, 1
    %v491 = vpop.permute.xlu0 %490
    %492 = vrot.lane.b32.xlu0 %v487, 1
    %v493 = vpop.permute.xlu0 %492
    %494 = vrot.lane.b32.xlu0 %v488, 1
    %v495 = vpop.permute.xlu0 %494
    %496 = vrot.lane.b32.xlu0 %v489, 1
    %v497 = vpop.permute.xlu0 %496
    %v498 = vrot.slane %v491, 4
    %v499 = vrot.slane %v493, 4
    %v500 = vrot.slane %v495, 4
    %v501 = vrot.slane %v497, 4
    %v502 = vsel %vm245, %v498, %v499
    %v503 = vsel %vm466, %v491, %v502
    %v504 = vsel %vm245, %v500, %v501
    %v505 = vsel %vm466, %v495, %v504
    %508 = vst [vmem:[#allocation5 + $0x68] sm:$0xff] %v503
    %509 = vst [vmem:[#allocation5 + $0x78] sm:$0xff] %v505
    %v510 = vld [vmem:[#allocation2 + $0x8] sm:$0xff]
    %v511 = vld [vmem:[#allocation2 + $0x10] sm:$0xff]
    %v514 = vunpack.c.l.b16 %v510
    %v515 = vunpack.c.l.b16 %v511
    %v516 = vunpack.c.h.b16 %v510
    %v517 = vunpack.c.h.b16 %v511
    %v518 = vpack.c.b16 %v515, %v514
    %v519 = vpack.c.b16 %v517, %v516
    %522 = vst [vmem:[#allocation5 + $0x80] sm:$0xff] %v518
    %523 = vst [vmem:[#allocation5 + $0x90] sm:$0xff] %v519
    %v524 = vld [vmem:[%s191 + $0x8] sm:$0xff]
    %v525 = vld [vmem:[%s191 + $0x10] sm:$0xff]
    %v528 = vunpack.c.l.b16 %v524
    %v529 = vunpack.c.l.b16 %v525
    %v530 = vunpack.c.h.b16 %v524
    %v531 = vunpack.c.h.b16 %v525
    %v532 = vpack.c.b16 %v529, %v528
    %v533 = vpack.c.b16 %v531, %v530
    %536 = vst [vmem:[#allocation5 + $0x88] sm:$0xff] %v532
    %537 = vst [vmem:[#allocation5 + $0x98] sm:$0xff] %v533
    %v538 = vld [vmem:[#allocation3 + $0x8] sm:$0xff]
    %v539 = vld [vmem:[#allocation3 + $0x10] sm:$0xff]
    %v540 = vld [vmem:[#allocation3 + $0x18] sm:$0xff]
    %v544 = vunpack.c.l.b16 %v538
    %v545 = vunpack.c.l.b16 %v539
    %v546 = vunpack.c.l.b16 %v540
    %v547 = vunpack.c.h.b16 %v538
    %v548 = vunpack.c.h.b16 %v539
    %v549 = vunpack.c.h.b16 %v540
    %v550 = vpack.c.b16 %v545, %v544
    %v551 = vpack.c.b16 %v546, %v546
    %v552 = vpack.c.b16 %v548, %v547
    %v553 = vpack.c.b16 %v549, %v549
    %554 = vrot.lane.b32.xlu0 %v550, 127
    %v555 = vpop.permute.xlu0 %554
    %556 = vrot.lane.b32.xlu0 %v551, 127
    %v557 = vpop.permute.xlu0 %556
    %558 = vrot.lane.b32.xlu0 %v552, 127
    %v559 = vpop.permute.xlu0 %558
    %560 = vrot.lane.b32.xlu0 %v553, 127
    %v561 = vpop.permute.xlu0 %560
    %v562 = vrot.slane %v555, 4
    %v563 = vrot.slane %v557, 4
    %v564 = vrot.slane %v559, 4
    %v565 = vrot.slane %v561, 4
    %v566 = vsel %vm245, %v562, %v563
    %vm567 = vcmask 1039360
    %v568 = vsel %vm567, %v555, %v566
    %v569 = vsel %vm245, %v564, %v565
    %v570 = vsel %vm567, %v559, %v569
    %573 = vst [vmem:[#allocation5 + $0xa0] sm:$0xff] %v568
    %574 = vst [vmem:[#allocation5 + $0xb0] sm:$0xff] %v570
    %v575 = vld [vmem:[%s209 + $0x8] sm:$0xff]
    %v576 = vld [vmem:[%s209 + $0x10] sm:$0xff]
    %v577 = vld [vmem:[%s209 + $0x18] sm:$0xff]
    %v581 = vunpack.c.l.b16 %v575
    %v582 = vunpack.c.l.b16 %v576
    %v583 = vunpack.c.l.b16 %v577
    %v584 = vunpack.c.h.b16 %v575
    %v585 = vunpack.c.h.b16 %v576
    %v586 = vunpack.c.h.b16 %v577
    %v587 = vpack.c.b16 %v582, %v581
    %v588 = vpack.c.b16 %v583, %v583
    %v589 = vpack.c.b16 %v585, %v584
    %v590 = vpack.c.b16 %v586, %v586
    %591 = vrot.lane.b32.xlu0 %v587, 127
    %v592 = vpop.permute.xlu0 %591
    %593 = vrot.lane.b32.xlu0 %v588, 127
    %v594 = vpop.permute.xlu0 %593
    %595 = vrot.lane.b32.xlu0 %v589, 127
    %v596 = vpop.permute.xlu0 %595
    %597 = vrot.lane.b32.xlu0 %v590, 127
    %v598 = vpop.permute.xlu0 %597
    %v599 = vrot.slane %v592, 4
    %v600 = vrot.slane %v594, 4
    %v601 = vrot.slane %v596, 4
    %v602 = vrot.slane %v598, 4
    %v603 = vsel %vm245, %v599, %v600
    %v604 = vsel %vm567, %v592, %v603
    %v605 = vsel %vm245, %v601, %v602
    %v606 = vsel %vm567, %v596, %v605
    %609 = vst [vmem:[#allocation5 + $0xa8] sm:$0xff] %v604
    %610 = vst [vmem:[#allocation5 + $0xb8] sm:$0xff] %v606
    %v611 = vld [vmem:[#allocation4 + $0x8] sm:$0xff]
    %v612 = vld [vmem:[#allocation4 + $0x10] sm:$0xff]
    %v613 = vld [vmem:[#allocation4 + $0x18] sm:$0xff]
    %v617 = vunpack.c.l.b16 %v611
    %v618 = vunpack.c.l.b16 %v612
    %v619 = vunpack.c.l.b16 %v613
    %v620 = vunpack.c.h.b16 %v611
    %v621 = vunpack.c.h.b16 %v612
    %v622 = vunpack.c.h.b16 %v613
    %v623 = vpack.c.b16 %v618, %v617
    %v624 = vpack.c.b16 %v619, %v619
    %v625 = vpack.c.b16 %v621, %v620
    %v626 = vpack.c.b16 %v622, %v622
    %627 = vrot.lane.b32.xlu0 %v623, 113
    %v628 = vpop.permute.xlu0 %627
    %629 = vrot.lane.b32.xlu0 %v624, 113
    %v630 = vpop.permute.xlu0 %629
    %631 = vrot.lane.b32.xlu0 %v625, 113
    %v632 = vpop.permute.xlu0 %631
    %633 = vrot.lane.b32.xlu0 %v626, 113
    %v634 = vpop.permute.xlu0 %633
    %v635 = vrot.slane %v628, 4
    %v636 = vrot.slane %v630, 4
    %v637 = vrot.slane %v632, 4
    %v638 = vrot.slane %v634, 4
    %v639 = vsel %vm245, %v635, %v636
    %vm640 = vcmask 924672
    %v641 = vsel %vm640, %v628, %v639
    %v642 = vsel %vm245, %v637, %v638
    %v643 = vsel %vm640, %v632, %v642
    %646 = vst [vmem:[#allocation5 + $0xc0] sm:$0xff] %v641
    %647 = vst [vmem:[#allocation5 + $0xd0] sm:$0xff] %v643
    %v648 = vld [vmem:[%s214 + $0x8] sm:$0xff]
    %v649 = vld [vmem:[%s214 + $0x10] sm:$0xff]
    %v650 = vld [vmem:[%s214 + $0x18] sm:$0xff]
    %v654 = vunpack.c.l.b16 %v648
    %v655 = vunpack.c.l.b16 %v649
    %v656 = vunpack.c.l.b16 %v650
    %v657 = vunpack.c.h.b16 %v648
    %v658 = vunpack.c.h.b16 %v649
    %v659 = vunpack.c.h.b16 %v650
    %v660 = vpack.c.b16 %v655, %v654
    %v661 = vpack.c.b16 %v656, %v656
    %v662 = vpack.c.b16 %v658, %v657
    %v663 = vpack.c.b16 %v659, %v659
    %664 = vrot.lane.b32.xlu0 %v660, 113
    %v665 = vpop.permute.xlu0 %664
    %666 = vrot.lane.b32.xlu0 %v661, 113
    %v667 = vpop.permute.xlu0 %666
    %668 = vrot.lane.b32.xlu0 %v662, 113
    %v669 = vpop.permute.xlu0 %668
    %670 = vrot.lane.b32.xlu0 %v663, 113
    %v671 = vpop.permute.xlu0 %670
    %v672 = vrot.slane %v665, 4
    %v673 = vrot.slane %v667, 4
    %v674 = vrot.slane %v669, 4
    %v675 = vrot.slane %v671, 4
    %v676 = vsel %vm245, %v672, %v673
    %v677 = vsel %vm640, %v665, %v676
    %v678 = vsel %vm245, %v674, %v675
    %v679 = vsel %vm640, %v669, %v678
    %682 = vst [vmem:[#allocation5 + $0xc8] sm:$0xff] %v677
    %683 = vst [vmem:[#allocation5 + $0xd8] sm:$0xff] %v679
    %v684 = vld [vmem:[#allocation2 + $0x8] sm:$0xff]
    %v685 = vld [vmem:[#allocation2 + $0x10] sm:$0xff]
    %v686 = vld [vmem:[#allocation2 + $0x18] sm:$0xff]
    %v690 = vunpack.c.l.b16 %v684
    %v691 = vunpack.c.l.b16 %v685
    %v692 = vunpack.c.l.b16 %v686
    %v693 = vunpack.c.h.b16 %v684
    %v694 = vunpack.c.h.b16 %v685
    %v695 = vunpack.c.h.b16 %v686
    %v696 = vpack.c.b16 %v691, %v690
    %v697 = vpack.c.b16 %v692, %v692
    %v698 = vpack.c.b16 %v694, %v693
    %v699 = vpack.c.b16 %v695, %v695
    %700 = vrot.lane.b32.xlu0 %v696, 112
    %v701 = vpop.permute.xlu0 %700
    %702 = vrot.lane.b32.xlu0 %v697, 112
    %v703 = vpop.permute.xlu0 %702
    %704 = vrot.lane.b32.xlu0 %v698, 112
    %v705 = vpop.permute.xlu0 %704
    %706 = vrot.lane.b32.xlu0 %v699, 112
    %v707 = vpop.permute.xlu0 %706
    %v708 = vrot.slane %v701, 4
    %v709 = vrot.slane %v703, 4
    %v710 = vrot.slane %v705, 4
    %v711 = vrot.slane %v707, 4
    %v712 = vsel %vm245, %v708, %v709
    %vm713 = vcmask 916480
    %v714 = vsel %vm713, %v701, %v712
    %v715 = vsel %vm245, %v710, %v711
    %v716 = vsel %vm713, %v705, %v715
    %719 = vst [vmem:[#allocation5 + $0xe0] sm:$0xff] %v714
    %720 = vst [vmem:[#allocation5 + $0xf0] sm:$0xff] %v716
    %v721 = vld [vmem:[%s191 + $0x8] sm:$0xff]
    %v722 = vld [vmem:[%s191 + $0x10] sm:$0xff]
    %v723 = vld [vmem:[%s191 + $0x18] sm:$0xff]
    %v727 = vunpack.c.l.b16 %v721
    %v728 = vunpack.c.l.b16 %v722
    %v729 = vunpack.c.l.b16 %v723
    %v730 = vunpack.c.h.b16 %v721
    %v731 = vunpack.c.h.b16 %v722
    %v732 = vunpack.c.h.b16 %v723
    %v733 = vpack.c.b16 %v728, %v727
    %v734 = vpack.c.b16 %v729, %v729
    %v735 = vpack.c.b16 %v731, %v730
    %v736 = vpack.c.b16 %v732, %v732
    %737 = vrot.lane.b32.xlu0 %v733, 112
    %v738 = vpop.permute.xlu0 %737
    %739 = vrot.lane.b32.xlu0 %v734, 112
    %v740 = vpop.permute.xlu0 %739
    %741 = vrot.lane.b32.xlu0 %v735, 112
    %v742 = vpop.permute.xlu0 %741
    %743 = vrot.lane.b32.xlu0 %v736, 112
    %v744 = vpop.permute.xlu0 %743
    %v745 = vrot.slane %v738, 4
    %v746 = vrot.slane %v740, 4
    %v747 = vrot.slane %v742, 4
    %v748 = vrot.slane %v744, 4
    %v749 = vsel %vm245, %v745, %v746
    %v750 = vsel %vm713, %v738, %v749
    %v751 = vsel %vm245, %v747, %v748
    %v752 = vsel %vm713, %v742, %v751
    %755 = vst [vmem:[#allocation5 + $0xe8] sm:$0xff] %v750
    %756 = vst [vmem:[#allocation5 + $0xf8] sm:$0xff] %v752
    %v757 = vld [vmem:[#allocation3 + $0x8] sm:$0xff]
    %v758 = vld [vmem:[#allocation3 + $0x10] sm:$0xff]
    %v759 = vld [vmem:[#allocation3 + $0x18] sm:$0xff]
    %v763 = vunpack.c.l.b16 %v757
    %v764 = vunpack.c.l.b16 %v758
    %v765 = vunpack.c.l.b16 %v759
    %v766 = vunpack.c.h.b16 %v757
    %v767 = vunpack.c.h.b16 %v758
    %v768 = vunpack.c.h.b16 %v759
    %v769 = vpack.c.b16 %v764, %v763
    %v770 = vpack.c.b16 %v765, %v765
    %v771 = vpack.c.b16 %v767, %v766
    %v772 = vpack.c.b16 %v768, %v768
    %773 = vrot.lane.b32.xlu0 %v769, 111
    %v774 = vpop.permute.xlu0 %773
    %775 = vrot.lane.b32.xlu0 %v770, 111
    %v776 = vpop.permute.xlu0 %775
    %777 = vrot.lane.b32.xlu0 %v771, 111
    %v778 = vpop.permute.xlu0 %777
    %779 = vrot.lane.b32.xlu0 %v772, 111
    %v780 = vpop.permute.xlu0 %779
    %v781 = vrot.slane %v774, 4
    %v782 = vrot.slane %v776, 4
    %v783 = vrot.slane %v778, 4
    %v784 = vrot.slane %v780, 4
    %v785 = vsel %vm245, %v781, %v782
    %vm786 = vcmask 908288
    %v787 = vsel %vm786, %v774, %v785
    %v788 = vsel %vm245, %v783, %v784
    %v789 = vsel %vm786, %v778, %v788
    %792 = vst [vmem:[#allocation5 + $0x100] sm:$0xff] %v787
    %793 = vst [vmem:[#allocation5 + $0x110] sm:$0xff] %v789
    %v794 = vld [vmem:[%s209 + $0x8] sm:$0xff]
    %v795 = vld [vmem:[%s209 + $0x10] sm:$0xff]
    %v796 = vld [vmem:[%s209 + $0x18] sm:$0xff]
    %v800 = vunpack.c.l.b16 %v794
    %v801 = vunpack.c.l.b16 %v795
    %v802 = vunpack.c.l.b16 %v796
    %v803 = vunpack.c.h.b16 %v794
    %v804 = vunpack.c.h.b16 %v795
    %v805 = vunpack.c.h.b16 %v796
    %v806 = vpack.c.b16 %v801, %v800
    %v807 = vpack.c.b16 %v802, %v802
    %v808 = vpack.c.b16 %v804, %v803
    %v809 = vpack.c.b16 %v805, %v805
    %810 = vrot.lane.b32.xlu0 %v806, 111
    %v811 = vpop.permute.xlu0 %810
    %812 = vrot.lane.b32.xlu0 %v807, 111
    %v813 = vpop.permute.xlu0 %812
    %814 = vrot.lane.b32.xlu0 %v808, 111
    %v815 = vpop.permute.xlu0 %814
    %816 = vrot.lane.b32.xlu0 %v809, 111
    %v817 = vpop.permute.xlu0 %816
    %v818 = vrot.slane %v811, 4
    %v819 = vrot.slane %v813, 4
    %v820 = vrot.slane %v815, 4
    %v821 = vrot.slane %v817, 4
    %v822 = vsel %vm245, %v818, %v819
    %v823 = vsel %vm786, %v811, %v822
    %v824 = vsel %vm245, %v820, %v821
    %v825 = vsel %vm786, %v815, %v824
    %828 = vst [vmem:[#allocation5 + $0x108] sm:$0xff] %v823
    %829 = vst [vmem:[#allocation5 + $0x118] sm:$0xff] %v825
    %v830 = vld [vmem:[%s3] sm:$0xff]
    %v831 = vld [vmem:[%s3 + $0x8] sm:$0xff]
    %v832 = vld [vmem:[%s3 + $0x10] sm:$0xff]
    %v833 = vld [vmem:[%s3 + $0x18] sm:$0xff]
    %v834 = vld [vmem:[#allocation5] sm:$0xff]
    %v835 = vld [vmem:[#allocation5 + $0x8] sm:$0xff]
    %v836 = vld [vmem:[#allocation5 + $0x10] sm:$0xff]
    %v837 = vld [vmem:[#allocation5 + $0x18] sm:$0xff]
    %v838 = vld [vmem:[#allocation5 + $0x20] sm:$0xff]
    %v839 = vld [vmem:[#allocation5 + $0x28] sm:$0xff]
    %v840 = vld [vmem:[#allocation5 + $0x30] sm:$0xff]
    %v841 = vld [vmem:[#allocation5 + $0x38] sm:$0xff]
    %v842 = vld [vmem:[#allocation5 + $0x40] sm:$0xff]
    %v843 = vld [vmem:[#allocation5 + $0x48] sm:$0xff]
    %v844 = vld [vmem:[#allocation5 + $0x50] sm:$0xff]
    %v845 = vld [vmem:[#allocation5 + $0x58] sm:$0xff]
    %v846 = vld [vmem:[#allocation5 + $0x60] sm:$0xff]
    %v847 = vld [vmem:[#allocation5 + $0x68] sm:$0xff]
    %v848 = vld [vmem:[#allocation5 + $0x70] sm:$0xff]
    %v849 = vld [vmem:[#allocation5 + $0x78] sm:$0xff]
    %v850 = vld [vmem:[#allocation5 + $0x80] sm:$0xff]
    %v851 = vld [vmem:[#allocation5 + $0x88] sm:$0xff]
    %v852 = vld [vmem:[#allocation5 + $0x90] sm:$0xff]
    %v853 = vld [vmem:[#allocation5 + $0x98] sm:$0xff]
    %v854 = vld [vmem:[#allocation5 + $0xa0] sm:$0xff]
    %v855 = vld [vmem:[#allocation5 + $0xa8] sm:$0xff]
    %v856 = vld [vmem:[#allocation5 + $0xb0] sm:$0xff]
    %v857 = vld [vmem:[#allocation5 + $0xb8] sm:$0xff]
    %v858 = vld [vmem:[#allocation5 + $0xc0] sm:$0xff]
    %v859 = vld [vmem:[#allocation5 + $0xc8] sm:$0xff]
    %v860 = vld [vmem:[#allocation5 + $0xd0] sm:$0xff]
    %v861 = vld [vmem:[#allocation5 + $0xd8] sm:$0xff]
    %v862 = vld [vmem:[#allocation5 + $0xe0] sm:$0xff]
    %v863 = vld [vmem:[#allocation5 + $0xe8] sm:$0xff]
    %v864 = vld [vmem:[#allocation5 + $0xf0] sm:$0xff]
    %v865 = vld [vmem:[#allocation5 + $0xf8] sm:$0xff]
    %v866 = vld [vmem:[#allocation5 + $0x100] sm:$0xff]
    %v867 = vld [vmem:[#allocation5 + $0x108] sm:$0xff]
    %v868 = vld [vmem:[#allocation5 + $0x110] sm:$0xff]
    %v869 = vld [vmem:[#allocation5 + $0x118] sm:$0xff]
    %v870 = vld [vmem:[#allocation5 + $0x120] sm:$0xff]
    %v871 = vld [vmem:[#allocation5 + $0x128] sm:$0xff]
    %v876 = vunpack.c.l.b16 %v830
    %v877 = vunpack.c.h.b16 %v830
    %v878 = vunpack.c.l.b16 %v831
    %v879 = vunpack.c.h.b16 %v831
    %v880 = vunpack.c.l.b16 %v832
    %v881 = vunpack.c.h.b16 %v832
    %v882 = vunpack.c.l.b16 %v833
    %v883 = vunpack.c.h.b16 %v833
    %v884 = vpack.c.b16 %v878, %v876
    %v885 = vpack.c.b16 %v879, %v877
    %v886 = vpack.c.b16 %v882, %v880
    %v887 = vpack.c.b16 %v883, %v881
    %v928 = vunpack.c.l.b16 %v834
    %v929 = vunpack.c.h.b16 %v834
    %v930 = vunpack.c.l.b16 %v835
    %v931 = vunpack.c.h.b16 %v835
    %v932 = vunpack.c.l.b16 %v836
    %v933 = vunpack.c.h.b16 %v836
    %v934 = vunpack.c.l.b16 %v837
    %v935 = vunpack.c.h.b16 %v837
    %v936 = vunpack.c.l.b16 %v838
    %v937 = vunpack.c.h.b16 %v838
    %v938 = vunpack.c.l.b16 %v839
    %v939 = vunpack.c.h.b16 %v839
    %v940 = vunpack.c.l.b16 %v840
    %v941 = vunpack.c.h.b16 %v840
    %v942 = vunpack.c.l.b16 %v841
    %v943 = vunpack.c.h.b16 %v841
    %v944 = vunpack.c.l.b16 %v842
    %v945 = vunpack.c.h.b16 %v842
    %v946 = vunpack.c.l.b16 %v843
    %v947 = vunpack.c.h.b16 %v843
    %v948 = vunpack.c.l.b16 %v844
    %v949 = vunpack.c.h.b16 %v844
    %v950 = vunpack.c.l.b16 %v845
    %v951 = vunpack.c.h.b16 %v845
    %v952 = vunpack.c.l.b16 %v846
    %v953 = vunpack.c.h.b16 %v846
    %v954 = vunpack.c.l.b16 %v847
    %v955 = vunpack.c.h.b16 %v847
    %v956 = vunpack.c.l.b16 %v848
    %v957 = vunpack.c.h.b16 %v848
    %v958 = vunpack.c.l.b16 %v849
    %v959 = vunpack.c.h.b16 %v849
    %v960 = vunpack.c.l.b16 %v850
    %v961 = vunpack.c.h.b16 %v850
    %v962 = vunpack.c.l.b16 %v851
    %v963 = vunpack.c.h.b16 %v851
    %v964 = vunpack.c.l.b16 %v852
    %v965 = vunpack.c.h.b16 %v852
    %v966 = vunpack.c.l.b16 %v853
    %v967 = vunpack.c.h.b16 %v853
    %v968 = vunpack.c.l.b16 %v854
    %v969 = vunpack.c.h.b16 %v854
    %v970 = vunpack.c.l.b16 %v855
    %v971 = vunpack.c.h.b16 %v855
    %v972 = vunpack.c.l.b16 %v856
    %v973 = vunpack.c.h.b16 %v856
    %v974 = vunpack.c.l.b16 %v857
    %v975 = vunpack.c.h.b16 %v857
    %v976 = vunpack.c.l.b16 %v858
    %v977 = vunpack.c.h.b16 %v858
    %v978 = vunpack.c.l.b16 %v859
    %v979 = vunpack.c.h.b16 %v859
    %v980 = vunpack.c.l.b16 %v860
    %v981 = vunpack.c.h.b16 %v860
    %v982 = vunpack.c.l.b16 %v861
    %v983 = vunpack.c.h.b16 %v861
    %v984 = vunpack.c.l.b16 %v862
    %v985 = vunpack.c.h.b16 %v862
    %v986 = vunpack.c.l.b16 %v863
    %v987 = vunpack.c.h.b16 %v863
    %v988 = vunpack.c.l.b16 %v864
    %v989 = vunpack.c.h.b16 %v864
    %v990 = vunpack.c.l.b16 %v865
    %v991 = vunpack.c.h.b16 %v865
    %v992 = vunpack.c.l.b16 %v866
    %v993 = vunpack.c.h.b16 %v866
    %v994 = vunpack.c.l.b16 %v867
    %v995 = vunpack.c.h.b16 %v867
    %v996 = vunpack.c.l.b16 %v868
    %v997 = vunpack.c.h.b16 %v868
    %v998 = vunpack.c.l.b16 %v869
    %v999 = vunpack.c.h.b16 %v869
    %v1000 = vunpack.c.l.b16 %v870
    %v1001 = vunpack.c.h.b16 %v870
    %v1002 = vunpack.c.l.b16 %v871
    %v1003 = vunpack.c.h.b16 %v871
    %v1004 = vpack.c.b16 %v932, %v928
    %v1005 = vpack.c.b16 %v933, %v929
    %v1006 = vpack.c.b16 %v934, %v930
    %v1007 = vpack.c.b16 %v935, %v931
    %v1008 = vpack.c.b16 %v940, %v936
    %v1009 = vpack.c.b16 %v941, %v937
    %v1010 = vpack.c.b16 %v942, %v938
    %v1011 = vpack.c.b16 %v943, %v939
    %v1012 = vpack.c.b16 %v948, %v944
    %v1013 = vpack.c.b16 %v949, %v945
    %v1014 = vpack.c.b16 %v950, %v946
    %v1015 = vpack.c.b16 %v951, %v947
    %v1016 = vpack.c.b16 %v956, %v952
    %v1017 = vpack.c.b16 %v957, %v953
    %v1018 = vpack.c.b16 %v958, %v954
    %v1019 = vpack.c.b16 %v959, %v955
    %v1020 = vpack.c.b16 %v964, %v960
    %v1021 = vpack.c.b16 %v965, %v961
    %v1022 = vpack.c.b16 %v966, %v962
    %v1023 = vpack.c.b16 %v967, %v963
    %v1024 = vpack.c.b16 %v972, %v968
    %v1025 = vpack.c.b16 %v973, %v969
    %v1026 = vpack.c.b16 %v974, %v970
    %v1027 = vpack.c.b16 %v975, %v971
    %v1028 = vpack.c.b16 %v980, %v976
    %v1029 = vpack.c.b16 %v981, %v977
    %v1030 = vpack.c.b16 %v982, %v978
    %v1031 = vpack.c.b16 %v983, %v979
    %v1032 = vpack.c.b16 %v988, %v984
    %v1033 = vpack.c.b16 %v989, %v985
    %v1034 = vpack.c.b16 %v990, %v986
    %v1035 = vpack.c.b16 %v991, %v987
    %v1036 = vpack.c.b16 %v996, %v992
    %v1037 = vpack.c.b16 %v997, %v993
    %v1038 = vpack.c.b16 %v998, %v994
    %v1039 = vpack.c.b16 %v999, %v995
    %v1040 = vpack.c.b16 %v1000, %v1000
    %v1041 = vpack.c.b16 %v1001, %v1001
    %v1042 = vpack.c.b16 %v1002, %v1002
    %v1043 = vpack.c.b16 %v1003, %v1003
    %vm1080 = vcmask 195584
    %v1082 = vsel %vm1080, %v885, 0
    %v1085 = vsel %vm1080, %v887, 0
    %vm1087 = vcmask 1043456
    %v1089 = vsel %vm1087, %v1040, 0
    %v1092 = vsel %vm1087, %v1041, 0
    %v1095 = vsel %vm1087, %v1042, 0
    %v1098 = vsel %vm1087, %v1043, 0
    %1100 = vmatprep.subr.bf16.mxu0 %v1005
    %1101 = vmatpush1.bf16.msra.mxu0 %v1004
    %1102 = vmatprep.subr.bf16.mxu0 %v1009
    %1103 = vmatpush1.bf16.msra.mxu0 %v1008
    %1104 = vmatprep.subr.bf16.mxu0 %v1013
    %1105 = vmatpush1.bf16.msra.mxu0 %v1012
    %1106 = vmatprep.subr.bf16.mxu0 %v1017
    %1107 = vmatpush1.bf16.msra.mxu0 %v1016
    %1108 = vmatprep.subr.bf16.mxu0 %v1021
    %1109 = vmatpush1.bf16.msra.mxu0 %v1020
    %1110 = vmatprep.subr.bf16.mxu0 %v1025
    %1111 = vmatpush1.bf16.msra.mxu0 %v1024
    %1112 = vmatprep.subr.bf16.mxu0 %v1029
    %1113 = vmatpush1.bf16.msra.mxu0 %v1028
    %1114 = vmatprep.subr.bf16.mxu0 %v1033
    %1115 = vmatpush1.bf16.msra.mxu0 %v1032
    %1116 = vmatprep.subr.bf16.mxu0 %v1037
    %1117 = vmatpush1.bf16.msra.mxu0 %v1036
    %1118 = vmatprep.subr.bf16.mxu0 %v1092
    %1119 = vmatpush1.bf16.msra.mxu0 %v1089
    %1120 = vmatprep.subr.bf16.mxu0 0
    %1121 = vmatpush1.bf16.msra.mxu0 0
    %1122 = vmatprep.subr.bf16.mxu0 0
    %1123 = vmatpush1.bf16.msra.mxu0 0
    %1124 = vmatprep.subr.bf16.mxu0 0
    %1125 = vmatpush1.bf16.msra.mxu0 0
    %1126 = vmatprep.subr.bf16.mxu0 0
    %1127 = vmatpush1.bf16.msra.mxu0 0
    %1128 = vmatprep.subr.bf16.mxu0 0
    %1129 = vmatpush1.bf16.msra.mxu0 0
    %1130 = vmatprep.subr.bf16.mxu0 0
    %1131 = vmatpush1.bf16.msra.mxu0 0
    %1132 = vmatprep.mubr.bf16.mxu0 %v1082
    %1133 = vmatmul.mubr.bf16.gmra.mrb[0].mxu0 %v884
    %v1134 = vpop.f32.mrb[0].mxu0
    %v1135 = vadd.f32 0.0, %v1134
    %v1136 = vpop.f32.mrb[0].mxu0
    %v1137 = vadd.f32 0.0, %v1136
    %v1138 = vpop.f32.mrb[0].mxu0
    %v1139 = vadd.f32 0.0, %v1138
    %v1140 = vpop.f32.mrb[0].mxu0
    %v1141 = vadd.f32 0.0, %v1140
    %1142 = vmatprep.mubr.bf16.mxu0 %v1085
    %1143 = vmatmul.mubr.bf16.gmra.mrb[0].mxu0 %v886
    %v1144 = vpop.f32.mrb[0].mxu0
    %v1145 = vadd.f32 0.0, %v1144
    %v1146 = vpop.f32.mrb[0].mxu0
    %v1147 = vadd.f32 0.0, %v1146
    %v1148 = vpop.f32.mrb[0].mxu0
    %v1149 = vadd.f32 0.0, %v1148
    %v1150 = vpop.f32.mrb[0].mxu0
    %v1151 = vadd.f32 0.0, %v1150
    %1152 = vdwg.mxu0
    %1153 = vmatprep.subr.bf16.mxu0 %v1007
    %1154 = vmatpush1.bf16.msra.mxu0 %v1006
    %1155 = vmatprep.subr.bf16.mxu0 %v1011
    %1156 = vmatpush1.bf16.msra.mxu0 %v1010
    %1157 = vmatprep.subr.bf16.mxu0 %v1015
    %1158 = vmatpush1.bf16.msra.mxu0 %v1014
    %1159 = vmatprep.subr.bf16.mxu0 %v1019
    %1160 = vmatpush1.bf16.msra.mxu0 %v1018
    %1161 = vmatprep.subr.bf16.mxu0 %v1023
    %1162 = vmatpush1.bf16.msra.mxu0 %v1022
    %1163 = vmatprep.subr.bf16.mxu0 %v1027
    %1164 = vmatpush1.bf16.msra.mxu0 %v1026
    %1165 = vmatprep.subr.bf16.mxu0 %v1031
    %1166 = vmatpush1.bf16.msra.mxu0 %v1030
    %1167 = vmatprep.subr.bf16.mxu0 %v1035
    %1168 = vmatpush1.bf16.msra.mxu0 %v1034
    %1169 = vmatprep.subr.bf16.mxu0 %v1039
    %1170 = vmatpush1.bf16.msra.mxu0 %v1038
    %1171 = vmatprep.subr.bf16.mxu0 %v1098
    %1172 = vmatpush1.bf16.msra.mxu0 %v1095
    %1173 = vmatprep.subr.bf16.mxu0 0
    %1174 = vmatpush1.bf16.msra.mxu0 0
    %1175 = vmatprep.subr.bf16.mxu0 0
    %1176 = vmatpush1.bf16.msra.mxu0 0
    %1177 = vmatprep.subr.bf16.mxu0 0
    %1178 = vmatpush1.bf16.msra.mxu0 0
    %1179 = vmatprep.subr.bf16.mxu0 0
    %1180 = vmatpush1.bf16.msra.mxu0 0
    %1181 = vmatprep.subr.bf16.mxu0 0
    %1182 = vmatpush1.bf16.msra.mxu0 0
    %1183 = vmatprep.subr.bf16.mxu0 0
    %1184 = vmatpush1.bf16.msra.mxu0 0
    %1185 = vmatprep.mubr.bf16.mxu0 %v1082
    %1186 = vmatmul.mubr.bf16.gmra.mrb[0].mxu0 %v884
    %v1187 = vpop.f32.mrb[0].mxu0
    %v1188 = vadd.f32 0.0, %v1187
    %v1189 = vpop.f32.mrb[0].mxu0
    %v1190 = vadd.f32 0.0, %v1189
    %v1191 = vpop.f32.mrb[0].mxu0
    %v1192 = vadd.f32 0.0, %v1191
    %v1193 = vpop.f32.mrb[0].mxu0
    %v1194 = vadd.f32 0.0, %v1193
    %1195 = vmatprep.mubr.bf16.mxu0 %v1085
    %1196 = vmatmul.mubr.bf16.gmra.mrb[0].mxu0 %v886
    %v1197 = vpop.f32.mrb[0].mxu0
    %v1198 = vadd.f32 0.0, %v1197
    %v1199 = vpop.f32.mrb[0].mxu0
    %v1200 = vadd.f32 0.0, %v1199
    %v1201 = vpop.f32.mrb[0].mxu0
    %v1202 = vadd.f32 0.0, %v1201
    %v1203 = vpop.f32.mrb[0].mxu0
    %v1204 = vadd.f32 0.0, %v1203
    %1205 = vdwg.mxu0
    %v1206 = vmul.f32 %v1135, 0.5
    %v1207 = vmul.f32 %v1137, 0.5
    %v1208 = vtanh.pop %v1206
    %v1209 = vtanh.pop %v1207
    %v1210 = vmul.f32 %v1208, 0.5
    %v1211 = vmul.f32 %v1209, 0.5
    %v1212 = vadd.f32 %v1210, 0.5
    %v1213 = vadd.f32 %v1211, 0.5
    %v1214 = vmul.f32 %v1139, 0.5
    %v1215 = vmul.f32 %v1141, 0.5
    %v1216 = vtanh.pop %v1214
    %v1217 = vtanh.pop %v1215
    %v1218 = vmul.f32 %v1216, 0.5
    %v1219 = vmul.f32 %v1217, 0.5
    %v1220 = vadd.f32 %v1218, 0.5
    %v1221 = vadd.f32 %v1219, 0.5
    %v1222 = vmul.f32 %v1145, 0.5
    %v1223 = vmul.f32 %v1147, 0.5
    %v1224 = vtanh.pop %v1222
    %v1225 = vtanh.pop %v1223
    %v1226 = vmul.f32 %v1224, 0.5
    %v1227 = vmul.f32 %v1225, 0.5
    %v1228 = vadd.f32 %v1226, 0.5
    %v1229 = vadd.f32 %v1227, 0.5
    %v1230 = vtanh.pop %v1149
    %v1231 = vtanh.pop %v1151
    %v1232 = vld [vmem:[#allocation10] sm:$0xff]
    %v1233 = vld [vmem:[#allocation10 + $0x8] sm:$0xff]
    %v1234 = vmul.f32 %v1220, %v1232
    %v1235 = vmul.f32 %v1221, %v1233
    %v1236 = vmul.f32 %v1212, %v1230
    %v1237 = vmul.f32 %v1213, %v1231
    %v1238 = vadd.f32 %v1234, %v1236
    %v1239 = vadd.f32 %v1235, %v1237
    %v1240 = vtanh.pop %v1238
    %v1241 = vtanh.pop %v1239
    %v1242 = vmul.f32 %v1228, %v1240
    %v1243 = vmul.f32 %v1229, %v1241
    %1244 = vst [vmem:[#allocation10] sm:$0xff] %v1238
    %1245 = vst [vmem:[#allocation10 + $0x8] sm:$0xff] %v1239
    %v1246 = vpack.c.bf16 %v1242, %v1242
    %v1247 = vpack.c.bf16 %v1243, %v1243
    %v1250 = vunpack.c.l.b16 %v1246
    %v1251 = vunpack.c.l.b16 %v1247
    %v1252 = vpack.c.b16 %v1251, %v1250
    %1254 = vst [vmem:[#allocation9] sm:$0xff] %v1252
    %v1255 = vmul.f32 %v1188, 0.5
    %v1256 = vmul.f32 %v1190, 0.5
    %v1257 = vtanh.pop %v1255
    %v1258 = vtanh.pop %v1256
    %v1259 = vmul.f32 %v1257, 0.5
    %v1260 = vmul.f32 %v1258, 0.5
    %v1261 = vadd.f32 %v1259, 0.5
    %v1262 = vadd.f32 %v1260, 0.5
    %v1263 = vmul.f32 %v1192, 0.5
    %v1264 = vmul.f32 %v1194, 0.5
    %v1265 = vtanh.pop %v1263
    %v1266 = vtanh.pop %v1264
    %v1267 = vmul.f32 %v1265, 0.5
    %v1268 = vmul.f32 %v1266, 0.5
    %v1269 = vadd.f32 %v1267, 0.5
    %v1270 = vadd.f32 %v1268, 0.5
    %v1271 = vmul.f32 %v1198, 0.5
    %v1272 = vmul.f32 %v1200, 0.5
    %v1273 = vtanh.pop %v1271
    %v1274 = vtanh.pop %v1272
    %v1275 = vmul.f32 %v1273, 0.5
    %v1276 = vmul.f32 %v1274, 0.5
    %v1277 = vadd.f32 %v1275, 0.5
    %v1278 = vadd.f32 %v1276, 0.5
    %v1279 = vtanh.pop %v1202
    %v1280 = vtanh.pop %v1204
    %s1281 = scalar_lea.vmem [#allocation10], 16
    %v1282 = vld [vmem:[%s1281] sm:$0xff]
    %v1283 = vld [vmem:[%s1281 + $0x8] sm:$0xff]
    %v1284 = vmul.f32 %v1269, %v1282
    %v1285 = vmul.f32 %v1270, %v1283
    %v1286 = vmul.f32 %v1261, %v1279
    %v1287 = vmul.f32 %v1262, %v1280
    %v1288 = vadd.f32 %v1284, %v1286
    %v1289 = vadd.f32 %v1285, %v1287
    %v1290 = vtanh.pop %v1288
    %v1291 = vtanh.pop %v1289
    %v1292 = vmul.f32 %v1277, %v1290
    %v1293 = vmul.f32 %v1278, %v1291
    %1294 = vst [vmem:[%s1281] sm:$0xff] %v1288
    %1295 = vst [vmem:[%s1281 + $0x8] sm:$0xff] %v1289
    %v1296 = vpack.c.bf16 %v1292, %v1292
    %v1297 = vpack.c.bf16 %v1293, %v1293
    %v1300 = vunpack.c.l.b16 %v1296
    %v1301 = vunpack.c.l.b16 %v1297
    %v1302 = vpack.c.b16 %v1301, %v1300
    %1304 = vst [vmem:[%s194] sm:$0xff] %v1302
    // Predicated region
    $region26: #{tpu_custom_call.1} parent=1 // pred_check
      _
    $region27: #{tpu_custom_call.1} parent=1 // pred_check_branch
      %1306 = sbr.rel (0) target = $region29
    $region28: #{tpu_custom_call.1} parent=1 // pred_region
      %s1308 = ssub.s32 256, 256
      %1309 = vsyncadd [#allocation8], %s1308
      %s1310 = sshll.u32 [#allocation9], 4
      %s1311 = int_to_ptr.vmem [resolvable:$true] %s1310
      %1316 = dma.vmem_to_hbm [thread:$0]  %s1311, 256, %s4, [#allocation8], 128, 128, 8
    $region29: #{tpu_custom_call.1} parent=1 // pred_fallthru
      _
    // Predicated region
    $region30: #{tpu_custom_call.1} parent=1 // pred_check
      _
    $region31: #{tpu_custom_call.1} parent=1 // pred_check_branch
      %1318 = sbr.rel (0) target = $region33
    $region32: #{tpu_custom_call.1} parent=1 // pred_region
      %s1320 = ssub.s32 512, 512
      %1321 = vsyncadd [#allocation11], %s1320
      %s1322 = sshll.u32 [#allocation10], 4
      %s1323 = int_to_ptr.vmem [resolvable:$true] %s1322
      %1328 = dma.vmem_to_hbm [thread:$0]  %s1323, 512, %s5, [#allocation11], 256, 256, 16
    $region33: #{tpu_custom_call.1} parent=1 // pred_fallthru
      _
    // Predicated region
    $region34: #{tpu_custom_call.1} parent=1 // pred_check
      _
    $region35: #{tpu_custom_call.1} parent=1 // pred_check_branch
      %1330 = sbr.rel (0) target = $region37
    $region36: #{tpu_custom_call.1} parent=1 // pred_region
      %1331 = dma.done [#allocation8], 256
    $region37: #{tpu_custom_call.1} parent=1 // pred_fallthru
      _
    // Predicated region
    $region38: #{tpu_custom_call.1} parent=1 // pred_check
      _
    $region39: #{tpu_custom_call.1} parent=1 // pred_check_branch
      %1333 = sbr.rel (0) target = $region41
    $region40: #{tpu_custom_call.1} parent=1 // pred_region
      %1334 = dma.done [#allocation11], 512
    $region41: #{tpu_custom_call.1} parent=1 // pred_fallthru
      _
    %1335 = vsyncpa [#allocation7], 1
    %1336 = vsyncpa [#allocation8], 1
    %1337 = vsyncpa [#allocation11], 1

</llo_original>
